<compile_context>
chip_gen: v7x
topology: tpu7x:2x2x1
jax: 0.10.0
libtpu: 0.0.40
codegen_flags: <defaults>
</compile_context>

<pallas_src>
import functools

import numpy as np
import jax
import jax.numpy as jnp
from jax import lax
from jax.experimental import pallas as pl
from jax.experimental.pallas import tpu as pltpu


# ----------------------------------------------------------------------------
# Pallas kernel: block_b batch elements per grid step.
# ----------------------------------------------------------------------------
def attention_kernel(x_ref, w_ref, b_ref, o_ref, *, n_dim, block_b):
    # x_ref: (block_b, n_dim, L) f32
    # w_ref: (3*n_dim, n_dim)    bf16  (scale folded into the k rows)
    # b_ref: (3*n_dim, 1)        f32   (scale folded into the k rows)
    # o_ref: (block_b, L, n_dim) f32
    w = w_ref[...]                 # resident bf16 weight slab (hoisted)
    b = b_ref[...]                 # f32 bias column (hoisted)

    # Static trip count (block_b is tiny) -> unrolled at trace time.
    for bi in range(block_b):
        x_bf = x_ref[bi].astype(jnp.bfloat16)                        # (n, L)

        # Fused K/Q/V projection in the transposed domain:
        #   qkv^T = W_fused @ x + b_fused      -> (3n, L), lane-dense in L.
        qkv_t = (jnp.dot(w, x_bf, preferred_element_type=jnp.float32)
                 + b)                                                 # f32

        k_t = qkv_t[:n_dim].astype(jnp.bfloat16)                      # (n, L)
        q_t = qkv_t[n_dim:2 * n_dim].astype(jnp.bfloat16)             # (n, L)
        v_t = qkv_t[2 * n_dim:].astype(jnp.bfloat16)                  # (n, L)

        # scores s[i, j] = sum_l k[l, i] * q[l, j]   (NT dot over the L axis;
        # the n_dim**-0.5 scale is already folded into k)
        s = lax.dot_general(k_t, q_t, (((1,), (1,)), ((), ())),
                            preferred_element_type=jnp.float32)       # (n, n)

        # softmax over torch dim=1 of the (B, n, n) weight == axis 0 here,
        # kept in f32 (v5e has no bf16 VPU/EUP).
        s_max = jnp.max(s, axis=0, keepdims=True)                     # (1, n)
        p = jnp.exp(s - s_max)                                        # (n, n)
        denom = jnp.sum(p, axis=0, keepdims=True)                     # (1, n)
        attn = (p * pl.reciprocal(denom, approx=True)).astype(jnp.bfloat16)

        # out[l, j] = sum_i v_t[i, l] * attn[i, j]  -> contract axis 0 of both
        # (no explicitly materialized v transpose).
        out = lax.dot_general(v_t, attn, (((0,), (0,)), ((), ())),
                              preferred_element_type=jnp.float32)     # (L, n)
        o_ref[bi] = out


# ----------------------------------------------------------------------------
# Wrapper
# ----------------------------------------------------------------------------
def attention_forward(x, w_fused, b_fused, *, n_dim, block_b=2):
    B, n, L = x.shape
    assert n == n_dim
    # Lane-dense / aligned-slice assumptions used by the kernel.
    assert n_dim % 128 == 0, "n_dim must be a multiple of 128"
    assert L % 128 == 0, "L must be a multiple of 128"
    if B % block_b != 0:
        block_b = 1

    kernel = functools.partial(attention_kernel, n_dim=n_dim, block_b=block_b)
    return pl.pallas_call(
        kernel,
        out_shape=jax.ShapeDtypeStruct((B, L, n_dim), jnp.float32),
        grid=(B // block_b,),
        in_specs=[
            pl.BlockSpec((block_b, n_dim, L), lambda b: (b, 0, 0)),   # x
            pl.BlockSpec((3 * n_dim, n_dim), lambda b: (0, 0)),       # fused W (bf16)
            pl.BlockSpec((3 * n_dim, 1), lambda b: (0, 0)),           # fused bias
        ],
        out_specs=pl.BlockSpec((block_b, L, n_dim), lambda b: (b, 0, 0)),
        compiler_params=pltpu.CompilerParams(
            dimension_semantics=("parallel",)),
    )(x, w_fused, b_fused)


# ----------------------------------------------------------------------------
# Deterministic parameter init (PyTorch nn.Linear-style) + packing
# ----------------------------------------------------------------------------
def init_attention_params(key, n_dim):
    ks = jax.random.split(key, 6)
    bound = 1.0 / np.sqrt(n_dim)

    def u(k, shape):
        return jax.random.uniform(k, shape, jnp.float32, -bound, bound)

    return dict(
        wk=u(ks[0], (n_dim, n_dim)), bk=u(ks[1], (n_dim,)),   # (out, in) layout
        wq=u(ks[2], (n_dim, n_dim)), bq=u(ks[3], (n_dim,)),
        wv=u(ks[4], (n_dim, n_dim)), bv=u(ks[5], (n_dim,)),
    )


def pack_params(p, n_dim):
    # PyTorch (out, in) weights stacked along out -> (3n, n): qkv^T = W @ x + b.
    # The softmax scale is folded into the K rows (done once, offline), and the
    # weight slab is stored in bf16 for native MXU throughput.
    scale = float(n_dim) ** -0.5
    w_fused = jnp.concatenate([p["wk"] * scale, p["wq"], p["wv"]],
                              axis=0).astype(jnp.bfloat16)
    b_fused = jnp.concatenate([p["bk"] * scale, p["bq"], p["bv"]],
                              axis=0)[:, None].astype(jnp.float32)
    return w_fused, b_fused


# ----------------------------------------------------------------------------
# Pure-JAX reference (plain XLA) for correctness check
# ----------------------------------------------------------------------------
def attention_ref(x, p, *, n_dim):
    hi = jax.lax.Precision.HIGHEST
    xT = jnp.transpose(x, (0, 2, 1))                               # (B, L, n)
    k = jnp.matmul(xT, p["wk"].T, precision=hi) + p["bk"]
    q = jnp.matmul(xT, p["wq"].T, precision=hi) + p["bq"]
    v = jnp.matmul(xT, p["wv"].T, precision=hi) + p["bv"]
    logits = jnp.einsum("bli,blj->bij", k, q, precision=hi) * (n_dim ** -0.5)
    w = jax.nn.softmax(logits, axis=1)
    return jnp.einsum("bli,bij->blj", v, w, precision=hi)          # (B, L, n)


if __name__ == "__main__":
    B, n_dim, L = 4, 128, 256   # lane-dense shapes: n_dim % 128 == 0, L % 128 == 0

    root = jax.random.PRNGKey(0)
    kp, kx = jax.random.split(root)
    params = init_attention_params(kp, n_dim)
    x = jax.random.normal(kx, (B, n_dim, L), jnp.float32)

    w_fused, b_fused = pack_params(params, n_dim)

    fwd = jax.jit(functools.partial(attention_forward, n_dim=n_dim, block_b=2))
    out = fwd(x, w_fused, b_fused)
    out = jax.block_until_ready(out)

    ref = attention_ref(x, params, n_dim=n_dim)
    # Tolerance covers (a) bf16 MXU operands (f32 accumulation kept), (b) MXU
    # pass-decomposition differences vs. the XLA f32 reference, and (c) the
    # approx reciprocal in the softmax denominator; any structural error would
    # be orders of magnitude larger.
    np.testing.assert_allclose(np.asarray(out), np.asarray(ref),
                               rtol=2e-2, atol=2e-2)
    print("KERNEL_OK")
</pallas_src>

<mosaic_0001>
module attributes {stable_mosaic.version = 11 : i64} {
  func.func @attention_kernel(%arg0: i32, %arg1: memref<2x128x256xf32, #tpu.memory_space<vmem>>, %arg2: memref<384x128xbf16, #tpu.memory_space<vmem>>, %arg3: memref<384x1xf32, #tpu.memory_space<vmem>>, %arg4: memref<2x256x128xf32, #tpu.memory_space<vmem>>) attributes {dimension_semantics = [#tpu.dimension_semantics<parallel>], iteration_bounds = array<i64: 2>, scalar_prefetch = 0 : i64, scratch_operands = 0 : i64, tpu.core_type = #tpu.core_type<tc>, window_params = [{transform_indices = @transform_0, window_bounds = array<i64: 2, 128, 256>}, {pipeline_mode = #tpu.pipeline_mode<synchronous>, transform_indices = @transform_1, window_bounds = array<i64: 384, 128>}, {pipeline_mode = #tpu.pipeline_mode<synchronous>, transform_indices = @transform_2, window_bounds = array<i64: 384, 1>}, {transform_indices = @transform_3, window_bounds = array<i64: 2, 256, 128>}]} {
    %c0 = arith.constant 0 : index
    %c0_0 = arith.constant 0 : index
    %0 = vector.load %arg2[%c0, %c0_0] : memref<384x128xbf16, #tpu.memory_space<vmem>>, vector<384x128xbf16>
    %c0_1 = arith.constant 0 : index
    %c0_2 = arith.constant 0 : index
    %1 = vector.load %arg3[%c0_1, %c0_2] : memref<384x1xf32, #tpu.memory_space<vmem>>, vector<384x1xf32>
    %c0_3 = arith.constant 0 : index
    %c0_4 = arith.constant 0 : index
    %c0_5 = arith.constant 0 : index
    %2 = vector.load %arg1[%c0_3, %c0_4, %c0_5] : memref<2x128x256xf32, #tpu.memory_space<vmem>>, vector<1x128x256xf32>
    %3 = vector.shape_cast %2 : vector<1x128x256xf32> to vector<128x256xf32>
    %4 = arith.truncf %3 : vector<128x256xf32> to vector<128x256xbf16>
    %cst = arith.constant dense<0.000000e+00> : vector<384x256xf32>
    %5 = tpu.matmul %0, %4, %cst {dimension_numbers = #tpu.dot_dimension_numbers<[1], [0], [0], [1], [0, 0, 1, 1], [], []>} : vector<384x128xbf16>, vector<128x256xbf16>, vector<384x256xf32> -> vector<384x256xf32>
    %6 = vector.broadcast %1 : vector<384x1xf32> to vector<384x256xf32>
    %7 = arith.addf %5, %6 : vector<384x256xf32>
    %8 = vector.extract_strided_slice %7 {offsets = [0, 0], sizes = [128, 256], strides = [1, 1]} : vector<384x256xf32> to vector<128x256xf32>
    %9 = arith.truncf %8 : vector<128x256xf32> to vector<128x256xbf16>
    %10 = vector.extract_strided_slice %7 {offsets = [128, 0], sizes = [128, 256], strides = [1, 1]} : vector<384x256xf32> to vector<128x256xf32>
    %11 = arith.truncf %10 : vector<128x256xf32> to vector<128x256xbf16>
    %12 = vector.extract_strided_slice %7 {offsets = [256, 0], sizes = [128, 256], strides = [1, 1]} : vector<384x256xf32> to vector<128x256xf32>
    %13 = arith.truncf %12 : vector<128x256xf32> to vector<128x256xbf16>
    %cst_6 = arith.constant dense<0.000000e+00> : vector<128x128xf32>
    %14 = tpu.matmul %9, %11, %cst_6 {dimension_numbers = #tpu.dot_dimension_numbers<[1], [1], [0], [0], [0, 0, 1, 0], [], []>} : vector<128x256xbf16>, vector<128x256xbf16>, vector<128x128xf32> -> vector<128x128xf32>
    %cst_7 = arith.constant dense<0xFF800000> : vector<128xf32>
    %15 = vector.multi_reduction <maximumf>, %14, %cst_7 [0] : vector<128x128xf32> to vector<128xf32>
    %16 = vector.shape_cast %15 : vector<128xf32> to vector<1x128xf32>
    %17 = vector.broadcast %16 : vector<1x128xf32> to vector<128x128xf32>
    %18 = arith.subf %14, %17 : vector<128x128xf32>
    %19 = math.exp %18 : vector<128x128xf32>
    %cst_8 = arith.constant dense<0.000000e+00> : vector<128xf32>
    %20 = vector.multi_reduction <add>, %19, %cst_8 [0] : vector<128x128xf32> to vector<128xf32>
    %21 = vector.shape_cast %20 : vector<128xf32> to vector<1x128xf32>
    %22 = tpu.reciprocal %21 {approx = true} : vector<1x128xf32> -> vector<1x128xf32>
    %23 = vector.broadcast %22 : vector<1x128xf32> to vector<128x128xf32>
    %24 = arith.mulf %19, %23 : vector<128x128xf32>
    %25 = arith.truncf %24 : vector<128x128xf32> to vector<128x128xbf16>
    %cst_9 = arith.constant dense<0.000000e+00> : vector<256x128xf32>
    %26 = tpu.matmul %13, %25, %cst_9 {dimension_numbers = #tpu.dot_dimension_numbers<[0], [0], [1], [1], [0, 1, 1, 1], [], []>} : vector<128x256xbf16>, vector<128x128xbf16>, vector<256x128xf32> -> vector<256x128xf32>
    %c0_10 = arith.constant 0 : index
    %c0_11 = arith.constant 0 : index
    %c0_12 = arith.constant 0 : index
    %27 = vector.load %arg4[%c0_10, %c0_11, %c0_12] : memref<2x256x128xf32, #tpu.memory_space<vmem>>, vector<1x256x128xf32>
    %28 = vector.shape_cast %27 : vector<1x256x128xf32> to vector<256x128xf32>
    %29 = vector.shape_cast %26 : vector<256x128xf32> to vector<1x256x128xf32>
    tpu.vector_store %arg4[%c0_10, %c0_11, %c0_12], %29 {strides = array<i32>} : memref<2x256x128xf32, #tpu.memory_space<vmem>>, vector<1x256x128xf32>,
    %c1 = arith.constant 1 : index
    %c0_13 = arith.constant 0 : index
    %c0_14 = arith.constant 0 : index
    %30 = vector.load %arg1[%c1, %c0_13, %c0_14] : memref<2x128x256xf32, #tpu.memory_space<vmem>>, vector<1x128x256xf32>
    %31 = vector.shape_cast %30 : vector<1x128x256xf32> to vector<128x256xf32>
    %32 = arith.truncf %31 : vector<128x256xf32> to vector<128x256xbf16>
    %cst_15 = arith.constant dense<0.000000e+00> : vector<384x256xf32>
    %33 = tpu.matmul %0, %32, %cst_15 {dimension_numbers = #tpu.dot_dimension_numbers<[1], [0], [0], [1], [0, 0, 1, 1], [], []>} : vector<384x128xbf16>, vector<128x256xbf16>, vector<384x256xf32> -> vector<384x256xf32>
    %34 = vector.broadcast %1 : vector<384x1xf32> to vector<384x256xf32>
    %35 = arith.addf %33, %34 : vector<384x256xf32>
    %36 = vector.extract_strided_slice %35 {offsets = [0, 0], sizes = [128, 256], strides = [1, 1]} : vector<384x256xf32> to vector<128x256xf32>
    %37 = arith.truncf %36 : vector<128x256xf32> to vector<128x256xbf16>
    %38 = vector.extract_strided_slice %35 {offsets = [128, 0], sizes = [128, 256], strides = [1, 1]} : vector<384x256xf32> to vector<128x256xf32>
    %39 = arith.truncf %38 : vector<128x256xf32> to vector<128x256xbf16>
    %40 = vector.extract_strided_slice %35 {offsets = [256, 0], sizes = [128, 256], strides = [1, 1]} : vector<384x256xf32> to vector<128x256xf32>
    %41 = arith.truncf %40 : vector<128x256xf32> to vector<128x256xbf16>
    %cst_16 = arith.constant dense<0.000000e+00> : vector<128x128xf32>
    %42 = tpu.matmul %37, %39, %cst_16 {dimension_numbers = #tpu.dot_dimension_numbers<[1], [1], [0], [0], [0, 0, 1, 0], [], []>} : vector<128x256xbf16>, vector<128x256xbf16>, vector<128x128xf32> -> vector<128x128xf32>
    %cst_17 = arith.constant dense<0xFF800000> : vector<128xf32>
    %43 = vector.multi_reduction <maximumf>, %42, %cst_17 [0] : vector<128x128xf32> to vector<128xf32>
    %44 = vector.shape_cast %43 : vector<128xf32> to vector<1x128xf32>
    %45 = vector.broadcast %44 : vector<1x128xf32> to vector<128x128xf32>
    %46 = arith.subf %42, %45 : vector<128x128xf32>
    %47 = math.exp %46 : vector<128x128xf32>
    %cst_18 = arith.constant dense<0.000000e+00> : vector<128xf32>
    %48 = vector.multi_reduction <add>, %47, %cst_18 [0] : vector<128x128xf32> to vector<128xf32>
    %49 = vector.shape_cast %48 : vector<128xf32> to vector<1x128xf32>
    %50 = tpu.reciprocal %49 {approx = true} : vector<1x128xf32> -> vector<1x128xf32>
    %51 = vector.broadcast %50 : vector<1x128xf32> to vector<128x128xf32>
    %52 = arith.mulf %47, %51 : vector<128x128xf32>
    %53 = arith.truncf %52 : vector<128x128xf32> to vector<128x128xbf16>
    %cst_19 = arith.constant dense<0.000000e+00> : vector<256x128xf32>
    %54 = tpu.matmul %41, %53, %cst_19 {dimension_numbers = #tpu.dot_dimension_numbers<[0], [0], [1], [1], [0, 1, 1, 1], [], []>} : vector<128x256xbf16>, vector<128x128xbf16>, vector<256x128xf32> -> vector<256x128xf32>
    %c1_20 = arith.constant 1 : index
    %c0_21 = arith.constant 0 : index
    %c0_22 = arith.constant 0 : index
    %55 = vector.load %arg4[%c1_20, %c0_21, %c0_22] : memref<2x256x128xf32, #tpu.memory_space<vmem>>, vector<1x256x128xf32>
    %56 = vector.shape_cast %55 : vector<1x256x128xf32> to vector<256x128xf32>
    %57 = vector.shape_cast %54 : vector<256x128xf32> to vector<1x256x128xf32>
    tpu.vector_store %arg4[%c1_20, %c0_21, %c0_22], %57 {strides = array<i32>} : memref<2x256x128xf32, #tpu.memory_space<vmem>>, vector<1x256x128xf32>,
    return
  }
  func.func @transform_0(%arg0: i32) -> (i32, i32, i32) {
    %c0_i32 = arith.constant 0 : i32
    %c0_i32_0 = arith.constant 0 : i32
    %c0_i32_1 = arith.constant 0 : i32
    return %arg0, %c0_i32, %c0_i32_0 : i32, i32, i32
  }
  func.func @transform_1(%arg0: i32) -> (i32, i32) {
    %c0_i32 = arith.constant 0 : i32
    %c0_i32_0 = arith.constant 0 : i32
    %c0_i32_1 = arith.constant 0 : i32
    return %c0_i32, %c0_i32_0 : i32, i32
  }
  func.func @transform_2(%arg0: i32) -> (i32, i32) {
    %c0_i32 = arith.constant 0 : i32
    %c0_i32_0 = arith.constant 0 : i32
    %c0_i32_1 = arith.constant 0 : i32
    return %c0_i32, %c0_i32_0 : i32, i32
  }
  func.func @transform_3(%arg0: i32) -> (i32, i32, i32) {
    %c0_i32 = arith.constant 0 : i32
    %c0_i32_0 = arith.constant 0 : i32
    %c0_i32_1 = arith.constant 0 : i32
    return %arg0, %c0_i32, %c0_i32_0 : i32, i32, i32
  }
}

</mosaic_0001>

<llo_original>
// kernel: attention_forward.1
$region0: #{attention_forward.1}
  #allocation0 [shape = 'u32[]', space=smem, size = 0x4, offset = 0x4, fixed_abs, tag = 'smem constant byte address 0x4 - core index']
  #allocation1 [shape = 'u32[144,128]{1,0:T(1,128)}', space=vmem, size = 0x12000, scoped, tag = 'internal scratch']
  %s0 = inlined_call_operand.hbm [shape: f32[4,128,256], index: 0, kind: input, shape index: {}]
  %s1 = inlined_call_operand.vmem [shape: bf16[384,128], index: 1, kind: input, shape index: {}]
  %s2 = inlined_call_operand.vmem [shape: f32[384,1], index: 2, kind: input, shape index: {}]
  %s3 = inlined_call_operand.hbm [shape: f32[4,256,128], index: 3, kind: output, shape index: {}]
  %s4 = sld [smem:[#allocation0]]
  $region49: #{attention_forward.1} parent=0
    _
  %s6 = ssub.s32 1, %s4
  %s7 = scalar_select 0, %s6, %s4
  $region1: #{attention_forward.1} parent=0
    #allocation2 [shape = 'u8[524288]{0}', space=vmem, size = 0x80000, scoped, tag = 'input window, operand 0']
    #allocation3 [shape = 's32[2]{0}', space=sflag, size = 0x8, scoped, tag = 'scoped memory for attention_forward.1']
    #allocation4 [shape = 's32[2]{0}', space=sflag, size = 0x8, scoped, tag = 'scoped memory for attention_forward.1']
    #allocation5 [shape = 'u8[524288]{0}', space=vmem, size = 0x80000, scoped, tag = 'output window, operand 0']
    %8 = vsyncpa [#allocation3], 0
    %s9 = scalar_lea.sflag [#allocation3], 1
    %10 = vsyncpa %s9, 0
    %11 = vsyncpa [#allocation4], 0
    %s12 = scalar_lea.sflag [#allocation4], 1
    %13 = vsyncpa %s12, 0
    loop: start=0, step=1, limit=4
    $region2: #{attention_forward.1} parent=1 // loop_pre_header
      _
    $region3: #{attention_forward.1} parent=1 // loop_header
      %s15 = sphi 0, %s19
      %p16 = scmp.ge.s32.totalorder %s15, 4
      %s25 = sphi 0, %s27
      %s28 = sphi 0, %s25
      %s29 = sphi 0, %s28
      %s45 = sphi 0, %s29
      %s49 = sphi 0, %s49
      %s51 = sphi 0, %s49
      %s52 = sphi 0, %s51
      %s66 = sphi 0, %s52
      %s70 = sphi 0, %s70
      %s72 = sphi 0, %s70
      %s73 = sphi 0, %s72
      %s87 = sphi 0, %s73
      %s93 = sphi 0, %s95
      %s96 = sphi 0, %s93
      %s97 = sphi 0, %s96
      %s113 = sphi 0, %s97
    $region4: #{attention_forward.1} parent=1 // loop_header_branch
      %18 = sbr.rel (%p16) target = $region8
    $region5: #{attention_forward.1} parent=1 // loop_body
      %s20 = ssub.s32 %s15, 1
      %s21 = ssub.s32 %s15, 2
      %s22 = sadd.s32 %s15, 1
      %s23 = ssub.s32 %s15, %s22
      %p24 = scmp.eq.s32.totalorder %s23, 0
      %s26 = sadd.s32 %s25, 1
      %s27 = scalar_select %p24, %s25, %s26
      %p30 = pneg %p24
      %p31 = scmp.eq.s32.totalorder %s15, 1
      %p32 = por %p30, %p31
      %p33 = scmp.ne.s32.totalorder %s25, %s28
      %p34 = scmp.eq.s32.totalorder %s15, 0
      %p35 = por %p33, %p34
      %p36 = scmp.ne.s32.totalorder %s25, %s28
      %p37 = scmp.eq.s32.totalorder %s20, 1
      %p38 = por %p36, %p37
      %p39 = scmp.ne.s32.totalorder %s28, %s29
      %p40 = scmp.eq.s32.totalorder %s20, 0
      %p41 = por %p39, %p40
      %p42 = scmp.ne.s32.totalorder %s28, %s29
      %p43 = scmp.eq.s32.totalorder %s21, 1
      %p44 = por %p42, %p43
      %p46 = scmp.ne.s32.totalorder %s29, %s45
      %p47 = scmp.eq.s32.totalorder %s21, 0
      %p48 = por %p46, %p47
      %s50 = sadd.s32 %s49, 1
      %p53 = scmp.eq.s32.totalorder %s15, 1
      %p54 = scmp.ne.s32.totalorder %s49, %s51
      %p55 = scmp.eq.s32.totalorder %s15, 0
      %p56 = por %p54, %p55
      %p57 = scmp.ne.s32.totalorder %s49, %s51
      %p58 = scmp.eq.s32.totalorder %s20, 1
      %p59 = por %p57, %p58
      %p60 = scmp.ne.s32.totalorder %s51, %s52
      %p61 = scmp.eq.s32.totalorder %s20, 0
      %p62 = por %p60, %p61
      %p63 = scmp.ne.s32.totalorder %s51, %s52
      %p64 = scmp.eq.s32.totalorder %s21, 1
      %p65 = por %p63, %p64
      %p67 = scmp.ne.s32.totalorder %s52, %s66
      %p68 = scmp.eq.s32.totalorder %s21, 0
      %p69 = por %p67, %p68
      %s71 = sadd.s32 %s70, 1
      %p74 = scmp.eq.s32.totalorder %s15, 1
      %p75 = scmp.ne.s32.totalorder %s70, %s72
      %p76 = scmp.eq.s32.totalorder %s15, 0
      %p77 = por %p75, %p76
      %p78 = scmp.ne.s32.totalorder %s70, %s72
      %p79 = scmp.eq.s32.totalorder %s20, 1
      %p80 = por %p78, %p79
      %p81 = scmp.ne.s32.totalorder %s72, %s73
      %p82 = scmp.eq.s32.totalorder %s20, 0
      %p83 = por %p81, %p82
      %p84 = scmp.ne.s32.totalorder %s72, %s73
      %p85 = scmp.eq.s32.totalorder %s21, 1
      %p86 = por %p84, %p85
      %p88 = scmp.ne.s32.totalorder %s73, %s87
      %p89 = scmp.eq.s32.totalorder %s21, 0
      %p90 = por %p88, %p89
      %s91 = ssub.s32 %s15, %s22
      %p92 = scmp.eq.s32.totalorder %s91, 0
      %s94 = sadd.s32 %s93, 1
      %s95 = scalar_select %p92, %s93, %s94
      %p98 = pneg %p92
      %p99 = scmp.eq.s32.totalorder %s15, 1
      %p100 = por %p98, %p99
      %p101 = scmp.ne.s32.totalorder %s93, %s96
      %p102 = scmp.eq.s32.totalorder %s15, 0
      %p103 = por %p101, %p102
      %p104 = scmp.ne.s32.totalorder %s93, %s96
      %p105 = scmp.eq.s32.totalorder %s20, 1
      %p106 = por %p104, %p105
      %p107 = scmp.ne.s32.totalorder %s96, %s97
      %p108 = scmp.eq.s32.totalorder %s20, 0
      %p109 = por %p107, %p108
      %p110 = scmp.ne.s32.totalorder %s96, %s97
      %p111 = scmp.eq.s32.totalorder %s21, 1
      %p112 = por %p110, %p111
      %p114 = scmp.ne.s32.totalorder %s97, %s113
      %p115 = scmp.eq.s32.totalorder %s21, 0
      %p116 = por %p114, %p115
      %p117 = scmp.le.s32.totalorder 1, %s15
      %p118 = scmp.lt.s32.totalorder %s15, 3
      %p119 = pnand %p117, %p118
      %p120 = pneg %p119
      // Predicated region
      $region9: #{attention_forward.1} parent=5 // pred_check
        _
      $region10: #{attention_forward.1} parent=5 // pred_check_branch
        %122 = sbr.rel (%p119) target = $region12
      $region11: #{attention_forward.1} parent=5 // pred_region
        %s123 = ssub.s32 %s15, 1
        // Predicated region
        $region13: #{attention_forward.1} parent=11 // pred_check
          %p124 = pneg %p62
        $region14: #{attention_forward.1} parent=11 // pred_check_branch
          %126 = sbr.rel (%p124) target = $region16
        $region15: #{attention_forward.1} parent=11 // pred_region
          _
        $region16: #{attention_forward.1} parent=11 // pred_fallthru
          _
        // Predicated region
        $region17: #{attention_forward.1} parent=11 // pred_check
          %p127 = pneg %p83
        $region18: #{attention_forward.1} parent=11 // pred_check_branch
          %129 = sbr.rel (%p127) target = $region20
        $region19: #{attention_forward.1} parent=11 // pred_region
          _
        $region20: #{attention_forward.1} parent=11 // pred_fallthru
          _
      $region12: #{attention_forward.1} parent=5 // pred_fallthru
        _
      %p130 = scmp.lt.s32.totalorder %s15, 2
      // Predicated region
      $region21: #{attention_forward.1} parent=5 // pred_check
        %p131 = pneg %p130
      $region22: #{attention_forward.1} parent=5 // pred_check_branch
        %133 = sbr.rel (%p131) target = $region24
      $region23: #{attention_forward.1} parent=5 // pred_region
        // Predicated region
        $region25: #{attention_forward.1} parent=23 // pred_check
          %p134 = pneg %p35
        $region26: #{attention_forward.1} parent=23 // pred_check_branch
          %136 = sbr.rel (%p134) target = $region28
        $region27: #{attention_forward.1} parent=23 // pred_region
          %s137 = sand.u32 %s25, 1
          %s138 = scalar_lea.sflag [#allocation3], %s137
          %s139 = sand.u32 %s25, 1
          %s140 = smul.addr %s139, 512
          %s141 = scalar_lea.vmem [#allocation2], %s140
          %s142 = smul.u32 2, %s15
          %s144 = ssub.s32 8192, 8192
          %145 = vsyncadd %s138, %s144
          %s146 = smul.addr %s142, 32
          %s147 = smul.addr %s146, 128
          %s148 = scalar_lea.hbm %s0, %s147
          %s149 = sshll.u32 %s141, 4
          %s150 = int_to_ptr.vmem [resolvable:$true] %s149
          %155 = dma.hbm_to_vmem [thread:$0]  %s148, 8192, %s150, %s138, 256, 256, 16
        $region28: #{attention_forward.1} parent=23 // pred_fallthru
          _
      $region24: #{attention_forward.1} parent=5 // pred_fallthru
        _
      %p156 = scmp.le.s32.totalorder 1, %s15
      %p157 = scmp.lt.s32.totalorder %s15, 3
      %p158 = pnand %p156, %p157
      %p159 = pneg %p158
      // Predicated region
      $region29: #{attention_forward.1} parent=5 // pred_check
        _
      $region30: #{attention_forward.1} parent=5 // pred_check_branch
        %161 = sbr.rel (%p158) target = $region32
      $region31: #{attention_forward.1} parent=5 // pred_region
        %s162 = ssub.s32 %s15, 1
        %s163 = sand.u32 %s28, 1
        %s164 = scalar_lea.sflag [#allocation3], %s163
        %s165 = sand.u32 %s28, 1
        %s166 = smul.addr %s165, 512
        %s167 = scalar_lea.vmem [#allocation2], %s166
        // Predicated region
        $region33: #{attention_forward.1} parent=31 // pred_check
          %p168 = pneg %p41
        $region34: #{attention_forward.1} parent=31 // pred_check_branch
          %170 = sbr.rel (%p168) target = $region36
        $region35: #{attention_forward.1} parent=31 // pred_region
          %171 = dma.done %s164, 8192
        $region36: #{attention_forward.1} parent=31 // pred_fallthru
          _
        %s172 = sand.u32 %s28, 1
        %s173 = scalar_lea.sflag [#allocation3], %s172
        %s174 = sand.u32 %s28, 1
        %s175 = smul.addr %s174, 512
        %s176 = scalar_lea.vmem [#allocation2], %s175
        %p177 = pneg %p41
        %p178 = pneg %p38
        %p179 = pneg %p62
        %p180 = pneg %p59
        %p181 = pneg %p83
        %p182 = pneg %p80
        %p183 = pneg %p109
        %p184 = pneg %p106
        %s185 = sand.u32 %s96, 1
        %s186 = scalar_lea.sflag [#allocation4], %s185
        %s187 = sand.u32 %s96, 1
        %s188 = smul.addr %s187, 512
        %s189 = scalar_lea.vmem [#allocation5], %s188
        %s190 = smul.u32 2, %s20
        %s191 = smul.u32 2, %s20
        %v193 = vld [vmem:[%s1] sm:$0xf]
        %v194 = vld [vmem:[%s1 + $0x4] sm:$0xf]
        %v195 = vld [vmem:[%s1 + $0x8] sm:$0xf]
        %v196 = vld [vmem:[%s1 + $0xc] sm:$0xf]
        %v197 = vld [vmem:[%s1 + $0x10] sm:$0xf]
        %v198 = vld [vmem:[%s1 + $0x14] sm:$0xf]
        %v199 = vld [vmem:[%s1 + $0x18] sm:$0xf]
        %v200 = vld [vmem:[%s1 + $0x1c] sm:$0xf]
        %v201 = vld [vmem:[%s1 + $0x20] sm:$0xf]
        %v202 = vld [vmem:[%s1 + $0x24] sm:$0xf]
        %v203 = vld [vmem:[%s1 + $0x28] sm:$0xf]
        %v204 = vld [vmem:[%s1 + $0x2c] sm:$0xf]
        %v205 = vld [vmem:[%s1 + $0x30] sm:$0xf]
        %v206 = vld [vmem:[%s1 + $0x34] sm:$0xf]
        %v207 = vld [vmem:[%s1 + $0x38] sm:$0xf]
        %v208 = vld [vmem:[%s1 + $0x3c] sm:$0xf]
        %v209 = vld [vmem:[%s1 + $0x40] sm:$0xf]
        %v210 = vld [vmem:[%s1 + $0x44] sm:$0xf]
        %v211 = vld [vmem:[%s1 + $0x48] sm:$0xf]
        %v212 = vld [vmem:[%s1 + $0x4c] sm:$0xf]
        %v213 = vld [vmem:[%s1 + $0x50] sm:$0xf]
        %v214 = vld [vmem:[%s1 + $0x54] sm:$0xf]
        %v215 = vld [vmem:[%s1 + $0x58] sm:$0xf]
        %v216 = vld [vmem:[%s1 + $0x5c] sm:$0xf]
        %v217 = vld [vmem:[%s1 + $0x60] sm:$0xf]
        %v218 = vld [vmem:[%s1 + $0x64] sm:$0xf]
        %v219 = vld [vmem:[%s1 + $0x68] sm:$0xf]
        %v220 = vld [vmem:[%s1 + $0x6c] sm:$0xf]
        %v221 = vld [vmem:[%s1 + $0x70] sm:$0xf]
        %v222 = vld [vmem:[%s1 + $0x74] sm:$0xf]
        %v223 = vld [vmem:[%s1 + $0x78] sm:$0xf]
        %v224 = vld [vmem:[%s1 + $0x7c] sm:$0xf]
        %v225 = vld [vmem:[%s1 + $0x80] sm:$0xf]
        %v226 = vld [vmem:[%s1 + $0x84] sm:$0xf]
        %v227 = vld [vmem:[%s1 + $0x88] sm:$0xf]
        %v228 = vld [vmem:[%s1 + $0x8c] sm:$0xf]
        %v229 = vld [vmem:[%s1 + $0x90] sm:$0xf]
        %v230 = vld [vmem:[%s1 + $0x94] sm:$0xf]
        %v231 = vld [vmem:[%s1 + $0x98] sm:$0xf]
        %v232 = vld [vmem:[%s1 + $0x9c] sm:$0xf]
        %v233 = vld [vmem:[%s1 + $0xa0] sm:$0xf]
        %v234 = vld [vmem:[%s1 + $0xa4] sm:$0xf]
        %v235 = vld [vmem:[%s1 + $0xa8] sm:$0xf]
        %v236 = vld [vmem:[%s1 + $0xac] sm:$0xf]
        %v237 = vld [vmem:[%s1 + $0xb0] sm:$0xf]
        %v238 = vld [vmem:[%s1 + $0xb4] sm:$0xf]
        %v239 = vld [vmem:[%s1 + $0xb8] sm:$0xf]
        %v240 = vld [vmem:[%s1 + $0xbc] sm:$0xf]
        %v241 = vld [vmem:[%s2] sm:$0xff]
        %v242 = vld [vmem:[%s2 + $0x8] sm:$0xff]
        %v243 = vld [vmem:[%s2 + $0x10] sm:$0xff]
        %v244 = vld [vmem:[%s2 + $0x18] sm:$0xff]
        %v245 = vld [vmem:[%s2 + $0x20] sm:$0xff]
        %v246 = vld [vmem:[%s2 + $0x28] sm:$0xff]
        %v247 = vld [vmem:[%s2 + $0x30] sm:$0xff]
        %v248 = vld [vmem:[%s2 + $0x38] sm:$0xff]
        %v249 = vld [vmem:[%s2 + $0x40] sm:$0xff]
        %v250 = vld [vmem:[%s2 + $0x48] sm:$0xff]
        %v251 = vld [vmem:[%s2 + $0x50] sm:$0xff]
        %v252 = vld [vmem:[%s2 + $0x58] sm:$0xff]
        %v253 = vld [vmem:[%s2 + $0x60] sm:$0xff]
        %v254 = vld [vmem:[%s2 + $0x68] sm:$0xff]
        %v255 = vld [vmem:[%s2 + $0x70] sm:$0xff]
        %v256 = vld [vmem:[%s2 + $0x78] sm:$0xff]
        %v257 = vld [vmem:[%s2 + $0x80] sm:$0xff]
        %v258 = vld [vmem:[%s2 + $0x88] sm:$0xff]
        %v259 = vld [vmem:[%s2 + $0x90] sm:$0xff]
        %v260 = vld [vmem:[%s2 + $0x98] sm:$0xff]
        %v261 = vld [vmem:[%s2 + $0xa0] sm:$0xff]
        %v262 = vld [vmem:[%s2 + $0xa8] sm:$0xff]
        %v263 = vld [vmem:[%s2 + $0xb0] sm:$0xff]
        %v264 = vld [vmem:[%s2 + $0xb8] sm:$0xff]
        %v265 = vld [vmem:[%s2 + $0xc0] sm:$0xff]
        %v266 = vld [vmem:[%s2 + $0xc8] sm:$0xff]
        %v267 = vld [vmem:[%s2 + $0xd0] sm:$0xff]
        %v268 = vld [vmem:[%s2 + $0xd8] sm:$0xff]
        %v269 = vld [vmem:[%s2 + $0xe0] sm:$0xff]
        %v270 = vld [vmem:[%s2 + $0xe8] sm:$0xff]
        %v271 = vld [vmem:[%s2 + $0xf0] sm:$0xff]
        %v272 = vld [vmem:[%s2 + $0xf8] sm:$0xff]
        %v273 = vld [vmem:[%s2 + $0x100] sm:$0xff]
        %v274 = vld [vmem:[%s2 + $0x108] sm:$0xff]
        %v275 = vld [vmem:[%s2 + $0x110] sm:$0xff]
        %v276 = vld [vmem:[%s2 + $0x118] sm:$0xff]
        %v277 = vld [vmem:[%s2 + $0x120] sm:$0xff]
        %v278 = vld [vmem:[%s2 + $0x128] sm:$0xff]
        %v279 = vld [vmem:[%s2 + $0x130] sm:$0xff]
        %v280 = vld [vmem:[%s2 + $0x138] sm:$0xff]
        %v281 = vld [vmem:[%s2 + $0x140] sm:$0xff]
        %v282 = vld [vmem:[%s2 + $0x148] sm:$0xff]
        %v283 = vld [vmem:[%s2 + $0x150] sm:$0xff]
        %v284 = vld [vmem:[%s2 + $0x158] sm:$0xff]
        %v285 = vld [vmem:[%s2 + $0x160] sm:$0xff]
        %v286 = vld [vmem:[%s2 + $0x168] sm:$0xff]
        %v287 = vld [vmem:[%s2 + $0x170] sm:$0xff]
        %v288 = vld [vmem:[%s2 + $0x178] sm:$0xff]
        %v289 = vld [vmem:[%s167] sm:$0xff]
        %v290 = vld [vmem:[%s167 + $0x8] sm:$0xff]
        %v291 = vld [vmem:[%s167 + $0x10] sm:$0xff]
        %v292 = vld [vmem:[%s167 + $0x18] sm:$0xff]
        %v293 = vld [vmem:[%s167 + $0x20] sm:$0xff]
        %v294 = vld [vmem:[%s167 + $0x28] sm:$0xff]
        %v295 = vld [vmem:[%s167 + $0x30] sm:$0xff]
        %v296 = vld [vmem:[%s167 + $0x38] sm:$0xff]
        %v297 = vld [vmem:[%s167 + $0x40] sm:$0xff]
        %v298 = vld [vmem:[%s167 + $0x48] sm:$0xff]
        %v299 = vld [vmem:[%s167 + $0x50] sm:$0xff]
        %v300 = vld [vmem:[%s167 + $0x58] sm:$0xff]
        %v301 = vld [vmem:[%s167 + $0x60] sm:$0xff]
        %v302 = vld [vmem:[%s167 + $0x68] sm:$0xff]
        %v303 = vld [vmem:[%s167 + $0x70] sm:$0xff]
        %v304 = vld [vmem:[%s167 + $0x78] sm:$0xff]
        %v305 = vld [vmem:[%s167 + $0x80] sm:$0xff]
        %v306 = vld [vmem:[%s167 + $0x88] sm:$0xff]
        %v307 = vld [vmem:[%s167 + $0x90] sm:$0xff]
        %v308 = vld [vmem:[%s167 + $0x98] sm:$0xff]
        %v309 = vld [vmem:[%s167 + $0xa0] sm:$0xff]
        %v310 = vld [vmem:[%s167 + $0xa8] sm:$0xff]
        %v311 = vld [vmem:[%s167 + $0xb0] sm:$0xff]
        %v312 = vld [vmem:[%s167 + $0xb8] sm:$0xff]
        %v313 = vld [vmem:[%s167 + $0xc0] sm:$0xff]
        %v314 = vld [vmem:[%s167 + $0xc8] sm:$0xff]
        %v315 = vld [vmem:[%s167 + $0xd0] sm:$0xff]
        %v316 = vld [vmem:[%s167 + $0xd8] sm:$0xff]
        %v317 = vld [vmem:[%s167 + $0xe0] sm:$0xff]
        %v318 = vld [vmem:[%s167 + $0xe8] sm:$0xff]
        %v319 = vld [vmem:[%s167 + $0xf0] sm:$0xff]
        %v320 = vld [vmem:[%s167 + $0xf8] sm:$0xff]
        %v321 = vpack.c.bf16 %v291, %v289
        %v322 = vpack.c.bf16 %v292, %v290
        %v323 = vpack.c.bf16 %v295, %v293
        %v324 = vpack.c.bf16 %v296, %v294
        %v325 = vpack.c.bf16 %v299, %v297
        %v326 = vpack.c.bf16 %v300, %v298
        %v327 = vpack.c.bf16 %v303, %v301
        %v328 = vpack.c.bf16 %v304, %v302
        %v329 = vpack.c.bf16 %v307, %v305
        %v330 = vpack.c.bf16 %v308, %v306
        %v331 = vpack.c.bf16 %v311, %v309
        %v332 = vpack.c.bf16 %v312, %v310
        %v333 = vpack.c.bf16 %v315, %v313
        %v334 = vpack.c.bf16 %v316, %v314
        %v335 = vpack.c.bf16 %v319, %v317
        %v336 = vpack.c.bf16 %v320, %v318
        %338 = vset.pattern.permute.xlu0 0
        %339 = vperm.xlu0 %338, %v241
        %v340 = vpop.permute.xlu0 %339
        %343 = vset.pattern.permute.xlu0 0
        %344 = vperm.xlu0 %343, %v242
        %v345 = vpop.permute.xlu0 %344
        %348 = vset.pattern.permute.xlu0 0
        %349 = vperm.xlu0 %348, %v243
        %v350 = vpop.permute.xlu0 %349
        %353 = vset.pattern.permute.xlu0 0
        %354 = vperm.xlu0 %353, %v244
        %v355 = vpop.permute.xlu0 %354
        %358 = vset.pattern.permute.xlu0 0
        %359 = vperm.xlu0 %358, %v245
        %v360 = vpop.permute.xlu0 %359
        %363 = vset.pattern.permute.xlu0 0
        %364 = vperm.xlu0 %363, %v246
        %v365 = vpop.permute.xlu0 %364
        %368 = vset.pattern.permute.xlu0 0
        %369 = vperm.xlu0 %368, %v247
        %v370 = vpop.permute.xlu0 %369
        %373 = vset.pattern.permute.xlu0 0
        %374 = vperm.xlu0 %373, %v248
        %v375 = vpop.permute.xlu0 %374
        %378 = vset.pattern.permute.xlu0 0
        %379 = vperm.xlu0 %378, %v249
        %v380 = vpop.permute.xlu0 %379
        %383 = vset.pattern.permute.xlu0 0
        %384 = vperm.xlu0 %383, %v250
        %v385 = vpop.permute.xlu0 %384
        %388 = vset.pattern.permute.xlu0 0
        %389 = vperm.xlu0 %388, %v251
        %v390 = vpop.permute.xlu0 %389
        %393 = vset.pattern.permute.xlu0 0
        %394 = vperm.xlu0 %393, %v252
        %v395 = vpop.permute.xlu0 %394
        %398 = vset.pattern.permute.xlu0 0
        %399 = vperm.xlu0 %398, %v253
        %v400 = vpop.permute.xlu0 %399
        %403 = vset.pattern.permute.xlu0 0
        %404 = vperm.xlu0 %403, %v254
        %v405 = vpop.permute.xlu0 %404
        %408 = vset.pattern.permute.xlu0 0
        %409 = vperm.xlu0 %408, %v255
        %v410 = vpop.permute.xlu0 %409
        %413 = vset.pattern.permute.xlu0 0
        %414 = vperm.xlu0 %413, %v256
        %v415 = vpop.permute.xlu0 %414
        %418 = vset.pattern.permute.xlu0 0
        %419 = vperm.xlu0 %418, %v257
        %v420 = vpop.permute.xlu0 %419
        %423 = vset.pattern.permute.xlu0 0
        %424 = vperm.xlu0 %423, %v258
        %v425 = vpop.permute.xlu0 %424
        %428 = vset.pattern.permute.xlu0 0
        %429 = vperm.xlu0 %428, %v259
        %v430 = vpop.permute.xlu0 %429
        %433 = vset.pattern.permute.xlu0 0
        %434 = vperm.xlu0 %433, %v260
        %v435 = vpop.permute.xlu0 %434
        %438 = vset.pattern.permute.xlu0 0
        %439 = vperm.xlu0 %438, %v261
        %v440 = vpop.permute.xlu0 %439
        %443 = vset.pattern.permute.xlu0 0
        %444 = vperm.xlu0 %443, %v262
        %v445 = vpop.permute.xlu0 %444
        %448 = vset.pattern.permute.xlu0 0
        %449 = vperm.xlu0 %448, %v263
        %v450 = vpop.permute.xlu0 %449
        %453 = vset.pattern.permute.xlu0 0
        %454 = vperm.xlu0 %453, %v264
        %v455 = vpop.permute.xlu0 %454
        %458 = vset.pattern.permute.xlu0 0
        %459 = vperm.xlu0 %458, %v265
        %v460 = vpop.permute.xlu0 %459
        %463 = vset.pattern.permute.xlu0 0
        %464 = vperm.xlu0 %463, %v266
        %v465 = vpop.permute.xlu0 %464
        %468 = vset.pattern.permute.xlu0 0
        %469 = vperm.xlu0 %468, %v267
        %v470 = vpop.permute.xlu0 %469
        %473 = vset.pattern.permute.xlu0 0
        %474 = vperm.xlu0 %473, %v268
        %v475 = vpop.permute.xlu0 %474
        %478 = vset.pattern.permute.xlu0 0
        %479 = vperm.xlu0 %478, %v269
        %v480 = vpop.permute.xlu0 %479
        %483 = vset.pattern.permute.xlu0 0
        %484 = vperm.xlu0 %483, %v270
        %v485 = vpop.permute.xlu0 %484
        %488 = vset.pattern.permute.xlu0 0
        %489 = vperm.xlu0 %488, %v271
        %v490 = vpop.permute.xlu0 %489
        %493 = vset.pattern.permute.xlu0 0
        %494 = vperm.xlu0 %493, %v272
        %v495 = vpop.permute.xlu0 %494
        %498 = vset.pattern.permute.xlu0 0
        %499 = vperm.xlu0 %498, %v273
        %v500 = vpop.permute.xlu0 %499
        %503 = vset.pattern.permute.xlu0 0
        %504 = vperm.xlu0 %503, %v274
        %v505 = vpop.permute.xlu0 %504
        %508 = vset.pattern.permute.xlu0 0
        %509 = vperm.xlu0 %508, %v275
        %v510 = vpop.permute.xlu0 %509
        %513 = vset.pattern.permute.xlu0 0
        %514 = vperm.xlu0 %513, %v276
        %v515 = vpop.permute.xlu0 %514
        %518 = vset.pattern.permute.xlu0 0
        %519 = vperm.xlu0 %518, %v277
        %v520 = vpop.permute.xlu0 %519
        %523 = vset.pattern.permute.xlu0 0
        %524 = vperm.xlu0 %523, %v278
        %v525 = vpop.permute.xlu0 %524
        %528 = vset.pattern.permute.xlu0 0
        %529 = vperm.xlu0 %528, %v279
        %v530 = vpop.permute.xlu0 %529
        %533 = vset.pattern.permute.xlu0 0
        %534 = vperm.xlu0 %533, %v280
        %v535 = vpop.permute.xlu0 %534
        %538 = vset.pattern.permute.xlu0 0
        %539 = vperm.xlu0 %538, %v281
        %v540 = vpop.permute.xlu0 %539
        %543 = vset.pattern.permute.xlu0 0
        %544 = vperm.xlu0 %543, %v282
        %v545 = vpop.permute.xlu0 %544
        %548 = vset.pattern.permute.xlu0 0
        %549 = vperm.xlu0 %548, %v283
        %v550 = vpop.permute.xlu0 %549
        %553 = vset.pattern.permute.xlu0 0
        %554 = vperm.xlu0 %553, %v284
        %v555 = vpop.permute.xlu0 %554
        %558 = vset.pattern.permute.xlu0 0
        %559 = vperm.xlu0 %558, %v285
        %v560 = vpop.permute.xlu0 %559
        %563 = vset.pattern.permute.xlu0 0
        %564 = vperm.xlu0 %563, %v286
        %v565 = vpop.permute.xlu0 %564
        %568 = vset.pattern.permute.xlu0 0
        %569 = vperm.xlu0 %568, %v287
        %v570 = vpop.permute.xlu0 %569
        %573 = vset.pattern.permute.xlu0 0
        %574 = vperm.xlu0 %573, %v288
        %v575 = vpop.permute.xlu0 %574
        %v625 = vunpack.c.l.b16 %v193
        %v626 = vunpack.c.l.b16 %v194
        %v627 = vunpack.c.l.b16 %v195
        %v628 = vunpack.c.l.b16 %v196
        %v629 = vunpack.c.l.b16 %v197
        %v630 = vunpack.c.l.b16 %v198
        %v631 = vunpack.c.l.b16 %v199
        %v632 = vunpack.c.l.b16 %v200
        %v633 = vunpack.c.l.b16 %v201
        %v634 = vunpack.c.l.b16 %v202
        %v635 = vunpack.c.l.b16 %v203
        %v636 = vunpack.c.l.b16 %v204
        %v637 = vunpack.c.l.b16 %v205
        %v638 = vunpack.c.l.b16 %v206
        %v639 = vunpack.c.l.b16 %v207
        %v640 = vunpack.c.l.b16 %v208
        %v641 = vunpack.c.l.b16 %v209
        %v642 = vunpack.c.l.b16 %v210
        %v643 = vunpack.c.l.b16 %v211
        %v644 = vunpack.c.l.b16 %v212
        %v645 = vunpack.c.l.b16 %v213
        %v646 = vunpack.c.l.b16 %v214
        %v647 = vunpack.c.l.b16 %v215
        %v648 = vunpack.c.l.b16 %v216
        %v649 = vunpack.c.l.b16 %v217
        %v650 = vunpack.c.l.b16 %v218
        %v651 = vunpack.c.l.b16 %v219
        %v652 = vunpack.c.l.b16 %v220
        %v653 = vunpack.c.l.b16 %v221
        %v654 = vunpack.c.l.b16 %v222
        %v655 = vunpack.c.l.b16 %v223
        %v656 = vunpack.c.l.b16 %v224
        %v657 = vunpack.c.l.b16 %v225
        %v658 = vunpack.c.l.b16 %v226
        %v659 = vunpack.c.l.b16 %v227
        %v660 = vunpack.c.l.b16 %v228
        %v661 = vunpack.c.l.b16 %v229
        %v662 = vunpack.c.l.b16 %v230
        %v663 = vunpack.c.l.b16 %v231
        %v664 = vunpack.c.l.b16 %v232
        %v665 = vunpack.c.l.b16 %v233
        %v666 = vunpack.c.l.b16 %v234
        %v667 = vunpack.c.l.b16 %v235
        %v668 = vunpack.c.l.b16 %v236
        %v669 = vunpack.c.l.b16 %v237
        %v670 = vunpack.c.l.b16 %v238
        %v671 = vunpack.c.l.b16 %v239
        %v672 = vunpack.c.l.b16 %v240
        %v673 = vpack.c.b16 %v626, %v625
        %v674 = vpack.c.b16 %v628, %v627
        %v675 = vpack.c.b16 %v630, %v629
        %v676 = vpack.c.b16 %v632, %v631
        %v677 = vpack.c.b16 %v634, %v633
        %v678 = vpack.c.b16 %v636, %v635
        %v679 = vpack.c.b16 %v638, %v637
        %v680 = vpack.c.b16 %v640, %v639
        %v681 = vpack.c.b16 %v642, %v641
        %v682 = vpack.c.b16 %v644, %v643
        %v683 = vpack.c.b16 %v646, %v645
        %v684 = vpack.c.b16 %v648, %v647
        %v685 = vpack.c.b16 %v650, %v649
        %v686 = vpack.c.b16 %v652, %v651
        %v687 = vpack.c.b16 %v654, %v653
        %v688 = vpack.c.b16 %v656, %v655
        %v689 = vpack.c.b16 %v658, %v657
        %v690 = vpack.c.b16 %v660, %v659
        %v691 = vpack.c.b16 %v662, %v661
        %v692 = vpack.c.b16 %v664, %v663
        %v693 = vpack.c.b16 %v666, %v665
        %v694 = vpack.c.b16 %v668, %v667
        %v695 = vpack.c.b16 %v670, %v669
        %v696 = vpack.c.b16 %v672, %v671
        %721 = vmatprep.subr.bf16.mxu0 %v322
        %722 = vmatpush1.bf16.msra.mxu0 %v321
        %723 = vmatprep.subr.bf16.mxu0 %v324
        %724 = vmatpush1.bf16.msra.mxu0 %v323
        %725 = vmatprep.subr.bf16.mxu0 %v326
        %726 = vmatpush1.bf16.msra.mxu0 %v325
        %727 = vmatprep.subr.bf16.mxu0 %v328
        %728 = vmatpush1.bf16.msra.mxu0 %v327
        %729 = vmatprep.subr.bf16.mxu0 %v330
        %730 = vmatpush1.bf16.msra.mxu0 %v329
        %731 = vmatprep.subr.bf16.mxu0 %v332
        %732 = vmatpush1.bf16.msra.mxu0 %v331
        %733 = vmatprep.subr.bf16.mxu0 %v334
        %734 = vmatpush1.bf16.msra.mxu0 %v333
        %735 = vmatprep.subr.bf16.mxu0 %v336
        %736 = vmatpush1.bf16.msra.mxu0 %v335
        %737 = vmatprep.subr.bf16.mxu0 0
        %738 = vmatpush1.bf16.msra.mxu0 0
        %739 = vmatprep.subr.bf16.mxu0 0
        %740 = vmatpush1.bf16.msra.mxu0 0
        %741 = vmatprep.subr.bf16.mxu0 0
        %742 = vmatpush1.bf16.msra.mxu0 0
        %743 = vmatprep.subr.bf16.mxu0 0
        %744 = vmatpush1.bf16.msra.mxu0 0
        %745 = vmatprep.subr.bf16.mxu0 0
        %746 = vmatpush1.bf16.msra.mxu0 0
        %747 = vmatprep.subr.bf16.mxu0 0
        %748 = vmatpush1.bf16.msra.mxu0 0
        %749 = vmatprep.subr.bf16.mxu0 0
        %750 = vmatpush1.bf16.msra.mxu0 0
        %751 = vmatprep.subr.bf16.mxu0 0
        %752 = vmatpush1.bf16.msra.mxu0 0
        %753 = vmatprep.mubr.bf16.mxu0 0
        %754 = vmatmul.mubr.bf16.gmra.mrb[0].mxu0 %v673
        %v755 = vpop.f32.mrb[0].mxu0
        %v756 = vadd.f32 %v340, %v755
        %v757 = vpop.f32.mrb[0].mxu0
        %v758 = vadd.f32 %v340, %v757
        %v759 = vpop.f32.mrb[0].mxu0
        %v760 = vadd.f32 %v345, %v759
        %v761 = vpop.f32.mrb[0].mxu0
        %v762 = vadd.f32 %v345, %v761
        %763 = vmatprep.mubr.bf16.mxu0 0
        %764 = vmatmul.mubr.bf16.gmra.mrb[0].mxu0 %v674
        %v765 = vpop.f32.mrb[0].mxu0
        %v766 = vadd.f32 %v350, %v765
        %v767 = vpop.f32.mrb[0].mxu0
        %v768 = vadd.f32 %v350, %v767
        %v769 = vpop.f32.mrb[0].mxu0
        %v770 = vadd.f32 %v355, %v769
        %v771 = vpop.f32.mrb[0].mxu0
        %v772 = vadd.f32 %v355, %v771
        %773 = vmatprep.mubr.bf16.mxu0 0
        %774 = vmatmul.mubr.bf16.gmra.mrb[0].mxu0 %v675
        %v775 = vpop.f32.mrb[0].mxu0
        %v776 = vadd.f32 %v360, %v775
        %v777 = vpop.f32.mrb[0].mxu0
        %v778 = vadd.f32 %v360, %v777
        %v779 = vpop.f32.mrb[0].mxu0
        %v780 = vadd.f32 %v365, %v779
        %v781 = vpop.f32.mrb[0].mxu0
        %v782 = vadd.f32 %v365, %v781
        %783 = vmatprep.mubr.bf16.mxu0 0
        %784 = vmatmul.mubr.bf16.gmra.mrb[0].mxu0 %v676
        %v785 = vpop.f32.mrb[0].mxu0
        %v786 = vadd.f32 %v370, %v785
        %v787 = vpop.f32.mrb[0].mxu0
        %v788 = vadd.f32 %v370, %v787
        %v789 = vpop.f32.mrb[0].mxu0
        %v790 = vadd.f32 %v375, %v789
        %v791 = vpop.f32.mrb[0].mxu0
        %v792 = vadd.f32 %v375, %v791
        %793 = vmatprep.mubr.bf16.mxu0 0
        %794 = vmatmul.mubr.bf16.gmra.mrb[0].mxu0 %v677
        %v795 = vpop.f32.mrb[0].mxu0
        %v796 = vadd.f32 %v380, %v795
        %v797 = vpop.f32.mrb[0].mxu0
        %v798 = vadd.f32 %v380, %v797
        %v799 = vpop.f32.mrb[0].mxu0
        %v800 = vadd.f32 %v385, %v799
        %v801 = vpop.f32.mrb[0].mxu0
        %v802 = vadd.f32 %v385, %v801
        %803 = vmatprep.mubr.bf16.mxu0 0
        %804 = vmatmul.mubr.bf16.gmra.mrb[0].mxu0 %v678
        %v805 = vpop.f32.mrb[0].mxu0
        %v806 = vadd.f32 %v390, %v805
        %v807 = vpop.f32.mrb[0].mxu0
        %v808 = vadd.f32 %v390, %v807
        %v809 = vpop.f32.mrb[0].mxu0
        %v810 = vadd.f32 %v395, %v809
        %v811 = vpop.f32.mrb[0].mxu0
        %v812 = vadd.f32 %v395, %v811
        %813 = vmatprep.mubr.bf16.mxu0 0
        %814 = vmatmul.mubr.bf16.gmra.mrb[0].mxu0 %v679
        %v815 = vpop.f32.mrb[0].mxu0
        %v816 = vadd.f32 %v400, %v815
        %v817 = vpop.f32.mrb[0].mxu0
        %v818 = vadd.f32 %v400, %v817
        %v819 = vpop.f32.mrb[0].mxu0
        %v820 = vadd.f32 %v405, %v819
        %v821 = vpop.f32.mrb[0].mxu0
        %v822 = vadd.f32 %v405, %v821
        %823 = vmatprep.mubr.bf16.mxu0 0
        %824 = vmatmul.mubr.bf16.gmra.mrb[0].mxu0 %v680
        %v825 = vpop.f32.mrb[0].mxu0
        %v826 = vadd.f32 %v410, %v825
        %v827 = vpop.f32.mrb[0].mxu0
        %v828 = vadd.f32 %v410, %v827
        %v829 = vpop.f32.mrb[0].mxu0
        %v830 = vadd.f32 %v415, %v829
        %v831 = vpop.f32.mrb[0].mxu0
        %v832 = vadd.f32 %v415, %v831
        %833 = vmatprep.mubr.bf16.mxu0 0
        %834 = vmatmul.mubr.bf16.gmra.mrb[0].mxu0 %v681
        %v835 = vpop.f32.mrb[0].mxu0
        %v836 = vadd.f32 %v420, %v835
        %v837 = vpop.f32.mrb[0].mxu0
        %v838 = vadd.f32 %v420, %v837
        %v839 = vpop.f32.mrb[0].mxu0
        %v840 = vadd.f32 %v425, %v839
        %v841 = vpop.f32.mrb[0].mxu0
        %v842 = vadd.f32 %v425, %v841
        %843 = vmatprep.mubr.bf16.mxu0 0
        %844 = vmatmul.mubr.bf16.gmra.mrb[0].mxu0 %v682
        %v845 = vpop.f32.mrb[0].mxu0
        %v846 = vadd.f32 %v430, %v845
        %v847 = vpop.f32.mrb[0].mxu0
        %v848 = vadd.f32 %v430, %v847
        %v849 = vpop.f32.mrb[0].mxu0
        %v850 = vadd.f32 %v435, %v849
        %v851 = vpop.f32.mrb[0].mxu0
        %v852 = vadd.f32 %v435, %v851
        %853 = vmatprep.mubr.bf16.mxu0 0
        %854 = vmatmul.mubr.bf16.gmra.mrb[0].mxu0 %v683
        %v855 = vpop.f32.mrb[0].mxu0
        %v856 = vadd.f32 %v440, %v855
        %v857 = vpop.f32.mrb[0].mxu0
        %v858 = vadd.f32 %v440, %v857
        %v859 = vpop.f32.mrb[0].mxu0
        %v860 = vadd.f32 %v445, %v859
        %v861 = vpop.f32.mrb[0].mxu0
        %v862 = vadd.f32 %v445, %v861
        %863 = vmatprep.mubr.bf16.mxu0 0
        %864 = vmatmul.mubr.bf16.gmra.mrb[0].mxu0 %v684
        %v865 = vpop.f32.mrb[0].mxu0
        %v866 = vadd.f32 %v450, %v865
        %v867 = vpop.f32.mrb[0].mxu0
        %v868 = vadd.f32 %v450, %v867
        %v869 = vpop.f32.mrb[0].mxu0
        %v870 = vadd.f32 %v455, %v869
        %v871 = vpop.f32.mrb[0].mxu0
        %v872 = vadd.f32 %v455, %v871
        %873 = vmatprep.mubr.bf16.mxu0 0
        %874 = vmatmul.mubr.bf16.gmra.mrb[0].mxu0 %v685
        %v875 = vpop.f32.mrb[0].mxu0
        %v876 = vadd.f32 %v460, %v875
        %v877 = vpop.f32.mrb[0].mxu0
        %v878 = vadd.f32 %v460, %v877
        %v879 = vpop.f32.mrb[0].mxu0
        %v880 = vadd.f32 %v465, %v879
        %v881 = vpop.f32.mrb[0].mxu0
        %v882 = vadd.f32 %v465, %v881
        %883 = vmatprep.mubr.bf16.mxu0 0
        %884 = vmatmul.mubr.bf16.gmra.mrb[0].mxu0 %v686
        %v885 = vpop.f32.mrb[0].mxu0
        %v886 = vadd.f32 %v470, %v885
        %v887 = vpop.f32.mrb[0].mxu0
        %v888 = vadd.f32 %v470, %v887
        %v889 = vpop.f32.mrb[0].mxu0
        %v890 = vadd.f32 %v475, %v889
        %v891 = vpop.f32.mrb[0].mxu0
        %v892 = vadd.f32 %v475, %v891
        %893 = vmatprep.mubr.bf16.mxu0 0
        %894 = vmatmul.mubr.bf16.gmra.mrb[0].mxu0 %v687
        %v895 = vpop.f32.mrb[0].mxu0
        %v896 = vadd.f32 %v480, %v895
        %v897 = vpop.f32.mrb[0].mxu0
        %v898 = vadd.f32 %v480, %v897
        %v899 = vpop.f32.mrb[0].mxu0
        %v900 = vadd.f32 %v485, %v899
        %v901 = vpop.f32.mrb[0].mxu0
        %v902 = vadd.f32 %v485, %v901
        %903 = vmatprep.mubr.bf16.mxu0 0
        %904 = vmatmul.mubr.bf16.gmra.mrb[0].mxu0 %v688
        %v905 = vpop.f32.mrb[0].mxu0
        %v906 = vadd.f32 %v490, %v905
        %v907 = vpop.f32.mrb[0].mxu0
        %v908 = vadd.f32 %v490, %v907
        %v909 = vpop.f32.mrb[0].mxu0
        %v910 = vadd.f32 %v495, %v909
        %v911 = vpop.f32.mrb[0].mxu0
        %v912 = vadd.f32 %v495, %v911
        %913 = vmatprep.mubr.bf16.mxu0 0
        %914 = vmatmul.mubr.bf16.gmra.mrb[0].mxu0 %v689
        %v915 = vpop.f32.mrb[0].mxu0
        %v916 = vadd.f32 %v500, %v915
        %v917 = vpop.f32.mrb[0].mxu0
        %v918 = vadd.f32 %v500, %v917
        %v919 = vpop.f32.mrb[0].mxu0
        %v920 = vadd.f32 %v505, %v919
        %v921 = vpop.f32.mrb[0].mxu0
        %v922 = vadd.f32 %v505, %v921
        %923 = vmatprep.mubr.bf16.mxu0 0
        %924 = vmatmul.mubr.bf16.gmra.mrb[0].mxu0 %v690
        %v925 = vpop.f32.mrb[0].mxu0
        %v926 = vadd.f32 %v510, %v925
        %v927 = vpop.f32.mrb[0].mxu0
        %v928 = vadd.f32 %v510, %v927
        %v929 = vpop.f32.mrb[0].mxu0
        %v930 = vadd.f32 %v515, %v929
        %v931 = vpop.f32.mrb[0].mxu0
        %v932 = vadd.f32 %v515, %v931
        %933 = vmatprep.mubr.bf16.mxu0 0
        %934 = vmatmul.mubr.bf16.gmra.mrb[0].mxu0 %v691
        %v935 = vpop.f32.mrb[0].mxu0
        %v936 = vadd.f32 %v520, %v935
        %v937 = vpop.f32.mrb[0].mxu0
        %v938 = vadd.f32 %v520, %v937
        %v939 = vpop.f32.mrb[0].mxu0
        %v940 = vadd.f32 %v525, %v939
        %v941 = vpop.f32.mrb[0].mxu0
        %v942 = vadd.f32 %v525, %v941
        %943 = vmatprep.mubr.bf16.mxu0 0
        %944 = vmatmul.mubr.bf16.gmra.mrb[0].mxu0 %v692
        %v945 = vpop.f32.mrb[0].mxu0
        %v946 = vadd.f32 %v530, %v945
        %v947 = vpop.f32.mrb[0].mxu0
        %v948 = vadd.f32 %v530, %v947
        %v949 = vpop.f32.mrb[0].mxu0
        %v950 = vadd.f32 %v535, %v949
        %v951 = vpop.f32.mrb[0].mxu0
        %v952 = vadd.f32 %v535, %v951
        %953 = vmatprep.mubr.bf16.mxu0 0
        %954 = vmatmul.mubr.bf16.gmra.mrb[0].mxu0 %v693
        %v955 = vpop.f32.mrb[0].mxu0
        %v956 = vadd.f32 %v540, %v955
        %v957 = vpop.f32.mrb[0].mxu0
        %v958 = vadd.f32 %v540, %v957
        %v959 = vpop.f32.mrb[0].mxu0
        %v960 = vadd.f32 %v545, %v959
        %v961 = vpop.f32.mrb[0].mxu0
        %v962 = vadd.f32 %v545, %v961
        %963 = vmatprep.mubr.bf16.mxu0 0
        %964 = vmatmul.mubr.bf16.gmra.mrb[0].mxu0 %v694
        %v965 = vpop.f32.mrb[0].mxu0
        %v966 = vadd.f32 %v550, %v965
        %v967 = vpop.f32.mrb[0].mxu0
        %v968 = vadd.f32 %v550, %v967
        %v969 = vpop.f32.mrb[0].mxu0
        %v970 = vadd.f32 %v555, %v969
        %v971 = vpop.f32.mrb[0].mxu0
        %v972 = vadd.f32 %v555, %v971
        %973 = vmatprep.mubr.bf16.mxu0 0
        %974 = vmatmul.mubr.bf16.gmra.mrb[0].mxu0 %v695
        %v975 = vpop.f32.mrb[0].mxu0
        %v976 = vadd.f32 %v560, %v975
        %v977 = vpop.f32.mrb[0].mxu0
        %v978 = vadd.f32 %v560, %v977
        %v979 = vpop.f32.mrb[0].mxu0
        %v980 = vadd.f32 %v565, %v979
        %v981 = vpop.f32.mrb[0].mxu0
        %v982 = vadd.f32 %v565, %v981
        %983 = vmatprep.mubr.bf16.mxu0 0
        %984 = vmatmul.mubr.bf16.gmra.mrb[0].mxu0 %v696
        %v985 = vpop.f32.mrb[0].mxu0
        %v986 = vadd.f32 %v570, %v985
        %v987 = vpop.f32.mrb[0].mxu0
        %v988 = vadd.f32 %v570, %v987
        %v989 = vpop.f32.mrb[0].mxu0
        %v990 = vadd.f32 %v575, %v989
        %v991 = vpop.f32.mrb[0].mxu0
        %v992 = vadd.f32 %v575, %v991
        %993 = vdwg.mxu0
        %v994 = vpack.c.bf16 %v760, %v756
        %v995 = vpack.c.bf16 %v762, %v758
        %v996 = vpack.c.bf16 %v770, %v766
        %v997 = vpack.c.bf16 %v772, %v768
        %v998 = vpack.c.bf16 %v780, %v776
        %v999 = vpack.c.bf16 %v782, %v778
        %v1000 = vpack.c.bf16 %v790, %v786
        %v1001 = vpack.c.bf16 %v792, %v788
        %v1002 = vpack.c.bf16 %v800, %v796
        %v1003 = vpack.c.bf16 %v802, %v798
        %v1004 = vpack.c.bf16 %v810, %v806
        %v1005 = vpack.c.bf16 %v812, %v808
        %v1006 = vpack.c.bf16 %v820, %v816
        %v1007 = vpack.c.bf16 %v822, %v818
        %v1008 = vpack.c.bf16 %v830, %v826
        %v1009 = vpack.c.bf16 %v832, %v828
        %v1010 = vpack.c.bf16 %v840, %v836
        %v1011 = vpack.c.bf16 %v842, %v838
        %v1012 = vpack.c.bf16 %v850, %v846
        %v1013 = vpack.c.bf16 %v852, %v848
        %v1014 = vpack.c.bf16 %v860, %v856
        %v1015 = vpack.c.bf16 %v862, %v858
        %v1016 = vpack.c.bf16 %v870, %v866
        %v1017 = vpack.c.bf16 %v872, %v868
        %v1018 = vpack.c.bf16 %v880, %v876
        %v1019 = vpack.c.bf16 %v882, %v878
        %v1020 = vpack.c.bf16 %v890, %v886
        %v1021 = vpack.c.bf16 %v892, %v888
        %v1022 = vpack.c.bf16 %v900, %v896
        %v1023 = vpack.c.bf16 %v902, %v898
        %v1024 = vpack.c.bf16 %v910, %v906
        %v1025 = vpack.c.bf16 %v912, %v908
        %v1026 = vpack.c.bf16 %v920, %v916
        %v1027 = vpack.c.bf16 %v922, %v918
        %v1028 = vpack.c.bf16 %v930, %v926
        %v1029 = vpack.c.bf16 %v932, %v928
        %v1030 = vpack.c.bf16 %v940, %v936
        %v1031 = vpack.c.bf16 %v942, %v938
        %v1032 = vpack.c.bf16 %v950, %v946
        %v1033 = vpack.c.bf16 %v952, %v948
        %v1034 = vpack.c.bf16 %v960, %v956
        %v1035 = vpack.c.bf16 %v962, %v958
        %v1036 = vpack.c.bf16 %v970, %v966
        %v1037 = vpack.c.bf16 %v972, %v968
        %v1038 = vpack.c.bf16 %v980, %v976
        %v1039 = vpack.c.bf16 %v982, %v978
        %v1040 = vpack.c.bf16 %v990, %v986
        %v1041 = vpack.c.bf16 %v992, %v988
        %1042 = vmatprep.subr.bf16.mxu0 %v1011
        %1043 = vmatpush1.bf16.xpose.msra.mxu0 %v1010
        %1044 = vmatprep.subr.bf16.mxu0 %v1013
        %1045 = vmatpush1.bf16.xpose.msra.mxu0 %v1012
        %1046 = vmatprep.subr.bf16.mxu0 %v1015
        %1047 = vmatpush1.bf16.xpose.msra.mxu0 %v1014
        %1048 = vmatprep.subr.bf16.mxu0 %v1017
        %1049 = vmatpush1.bf16.xpose.msra.mxu0 %v1016
        %1050 = vmatprep.subr.bf16.mxu0 %v1019
        %1051 = vmatpush1.bf16.xpose.msra.mxu0 %v1018
        %1052 = vmatprep.subr.bf16.mxu0 %v1021
        %1053 = vmatpush1.bf16.xpose.msra.mxu0 %v1020
        %1054 = vmatprep.subr.bf16.mxu0 %v1023
        %1055 = vmatpush1.bf16.xpose.msra.mxu0 %v1022
        %1056 = vmatprep.subr.bf16.mxu0 %v1025
        %1057 = vmatpush1.bf16.xpose.msra.mxu0 %v1024
        %1058 = vmatprep.subr.bf16.mxu0 0
        %1059 = vmatpush1.bf16.xpose.msra.mxu0 0
        %1060 = vmatprep.subr.bf16.mxu0 0
        %1061 = vmatpush1.bf16.xpose.msra.mxu0 0
        %1062 = vmatprep.subr.bf16.mxu0 0
        %1063 = vmatpush1.bf16.xpose.msra.mxu0 0
        %1064 = vmatprep.subr.bf16.mxu0 0
        %1065 = vmatpush1.bf16.xpose.msra.mxu0 0
        %1066 = vmatprep.subr.bf16.mxu0 0
        %1067 = vmatpush1.bf16.xpose.msra.mxu0 0
        %1068 = vmatprep.subr.bf16.mxu0 0
        %1069 = vmatpush1.bf16.xpose.msra.mxu0 0
        %1070 = vmatprep.subr.bf16.mxu0 0
        %1071 = vmatpush1.bf16.xpose.msra.mxu0 0
        %1072 = vmatprep.subr.bf16.mxu0 0
        %1073 = vmatpush1.bf16.xpose.msra.mxu0 0
        %1074 = vmatprep.mubr.bf16.mxu0 %v995
        %1075 = vmatmul.mubr.bf16.gmra.mrb[0].mxu0 %v994
        %v1076 = vpop.f32.mrb[0].mxu0
        %v1077 = vadd.f32 0.0, %v1076
        %v1078 = vpop.f32.mrb[0].mxu0
        %v1079 = vpop.f32.mrb[0].mxu0
        %v1080 = vadd.f32 0.0, %v1079
        %v1081 = vpop.f32.mrb[0].mxu0
        %1082 = vmatprep.mubr.bf16.mxu0 %v997
        %1083 = vmatmul.mubr.bf16.gmra.mrb[0].mxu0 %v996
        %v1084 = vpop.f32.mrb[0].mxu0
        %v1085 = vadd.f32 0.0, %v1084
        %v1086 = vpop.f32.mrb[0].mxu0
        %v1087 = vpop.f32.mrb[0].mxu0
        %v1088 = vadd.f32 0.0, %v1087
        %v1089 = vpop.f32.mrb[0].mxu0
        %1090 = vmatprep.mubr.bf16.mxu0 %v999
        %1091 = vmatmul.mubr.bf16.gmra.mrb[0].mxu0 %v998
        %v1092 = vpop.f32.mrb[0].mxu0
        %v1093 = vadd.f32 0.0, %v1092
        %v1094 = vpop.f32.mrb[0].mxu0
        %v1095 = vpop.f32.mrb[0].mxu0
        %v1096 = vadd.f32 0.0, %v1095
        %v1097 = vpop.f32.mrb[0].mxu0
        %1098 = vmatprep.mubr.bf16.mxu0 %v1001
        %1099 = vmatmul.mubr.bf16.gmra.mrb[0].mxu0 %v1000
        %v1100 = vpop.f32.mrb[0].mxu0
        %v1101 = vadd.f32 0.0, %v1100
        %v1102 = vpop.f32.mrb[0].mxu0
        %v1103 = vpop.f32.mrb[0].mxu0
        %v1104 = vadd.f32 0.0, %v1103
        %v1105 = vpop.f32.mrb[0].mxu0
        %1106 = vmatprep.mubr.bf16.mxu0 %v1003
        %1107 = vmatmul.mubr.bf16.gmra.mrb[0].mxu0 %v1002
        %v1108 = vpop.f32.mrb[0].mxu0
        %v1109 = vadd.f32 0.0, %v1108
        %v1110 = vpop.f32.mrb[0].mxu0
        %v1111 = vpop.f32.mrb[0].mxu0
        %v1112 = vadd.f32 0.0, %v1111
        %v1113 = vpop.f32.mrb[0].mxu0
        %1114 = vmatprep.mubr.bf16.mxu0 %v1005
        %1115 = vmatmul.mubr.bf16.gmra.mrb[0].mxu0 %v1004
        %v1116 = vpop.f32.mrb[0].mxu0
        %v1117 = vadd.f32 0.0, %v1116
        %v1118 = vpop.f32.mrb[0].mxu0
        %v1119 = vpop.f32.mrb[0].mxu0
        %v1120 = vadd.f32 0.0, %v1119
        %v1121 = vpop.f32.mrb[0].mxu0
        %1122 = vmatprep.mubr.bf16.mxu0 %v1007
        %1123 = vmatmul.mubr.bf16.gmra.mrb[0].mxu0 %v1006
        %v1124 = vpop.f32.mrb[0].mxu0
        %v1125 = vadd.f32 0.0, %v1124
        %v1126 = vpop.f32.mrb[0].mxu0
        %v1127 = vpop.f32.mrb[0].mxu0
        %v1128 = vadd.f32 0.0, %v1127
        %v1129 = vpop.f32.mrb[0].mxu0
        %1130 = vmatprep.mubr.bf16.mxu0 %v1009
        %1131 = vmatmul.mubr.bf16.gmra.mrb[0].mxu0 %v1008
        %v1132 = vpop.f32.mrb[0].mxu0
        %v1133 = vadd.f32 0.0, %v1132
        %v1134 = vpop.f32.mrb[0].mxu0
        %v1135 = vpop.f32.mrb[0].mxu0
        %v1136 = vadd.f32 0.0, %v1135
        %v1137 = vpop.f32.mrb[0].mxu0
        %1138 = vdwg.mxu0
        %v1139 = vmax.f32 %v1077, %v1093
        %v1140 = vmax.f32 %v1080, %v1096
        %v1141 = vmax.f32 %v1085, %v1101
        %v1142 = vmax.f32 %v1088, %v1104
        %v1143 = vmax.f32 %v1139, %v1109
        %v1144 = vmax.f32 %v1140, %v1112
        %v1145 = vmax.f32 %v1141, %v1117
        %v1146 = vmax.f32 %v1142, %v1120
        %v1147 = vmax.f32 %v1143, %v1125
        %v1148 = vmax.f32 %v1144, %v1128
        %v1149 = vmax.f32 %v1145, %v1133
        %v1150 = vmax.f32 %v1146, %v1136
        %v1151 = vmax.f32 %v1147, %v1148
        %v1152 = vmax.f32 %v1149, %v1150
        %v1153 = vmax.f32 %v1151, %v1152
        %v1154 = vrot.slane %v1153, 4
        %v1155 = vmax.f32 %v1153, %v1154
        %v1156 = vrot.slane %v1155, 2
        %v1157 = vmax.f32 %v1155, %v1156
        %v1158 = vrot.slane %v1157, 1
        %v1159 = vmax.f32 %v1157, %v1158
        %v1160 = vsub.f32 %v1077, %v1159
        %v1161 = vsub.f32 %v1080, %v1159
        %v1162 = vsub.f32 %v1085, %v1159
        %v1163 = vsub.f32 %v1088, %v1159
        %v1164 = vsub.f32 %v1093, %v1159
        %v1165 = vsub.f32 %v1096, %v1159
        %v1166 = vsub.f32 %v1101, %v1159
        %v1167 = vsub.f32 %v1104, %v1159
        %v1168 = vsub.f32 %v1109, %v1159
        %v1169 = vsub.f32 %v1112, %v1159
        %v1170 = vsub.f32 %v1117, %v1159
        %v1171 = vsub.f32 %v1120, %v1159
        %v1172 = vsub.f32 %v1125, %v1159
        %v1173 = vsub.f32 %v1128, %v1159
        %v1174 = vsub.f32 %v1133, %v1159
        %v1175 = vsub.f32 %v1136, %v1159
        %v1176 = vmul.f32 %v1160, 1.442695
        %v1177 = vpow.pop %v1176
        %v1178 = vmul.f32 %v1161, 1.442695
        %v1179 = vpow.pop %v1178
        %v1180 = vmul.f32 %v1162, 1.442695
        %v1181 = vpow.pop %v1180
        %v1182 = vmul.f32 %v1163, 1.442695
        %v1183 = vpow.pop %v1182
        %v1184 = vmul.f32 %v1164, 1.442695
        %v1185 = vpow.pop %v1184
        %v1186 = vmul.f32 %v1165, 1.442695
        %v1187 = vpow.pop %v1186
        %v1188 = vmul.f32 %v1166, 1.442695
        %v1189 = vpow.pop %v1188
        %v1190 = vmul.f32 %v1167, 1.442695
        %v1191 = vpow.pop %v1190
        %v1192 = vmul.f32 %v1168, 1.442695
        %v1193 = vpow.pop %v1192
        %v1194 = vmul.f32 %v1169, 1.442695
        %v1195 = vpow.pop %v1194
        %v1196 = vmul.f32 %v1170, 1.442695
        %v1197 = vpow.pop %v1196
        %v1198 = vmul.f32 %v1171, 1.442695
        %v1199 = vpow.pop %v1198
        %v1200 = vmul.f32 %v1172, 1.442695
        %v1201 = vpow.pop %v1200
        %v1202 = vmul.f32 %v1173, 1.442695
        %v1203 = vpow.pop %v1202
        %v1204 = vmul.f32 %v1174, 1.442695
        %v1205 = vpow.pop %v1204
        %v1206 = vmul.f32 %v1175, 1.442695
        %v1207 = vpow.pop %v1206
        %v1208 = vadd.f32 %v1177, %v1179
        %v1209 = vadd.f32 %v1208, %v1181
        %v1210 = vadd.f32 %v1209, %v1183
        %v1211 = vadd.f32 %v1210, %v1185
        %v1212 = vadd.f32 %v1211, %v1187
        %v1213 = vadd.f32 %v1212, %v1189
        %v1214 = vadd.f32 %v1213, %v1191
        %v1215 = vadd.f32 %v1214, %v1193
        %v1216 = vadd.f32 %v1215, %v1195
        %v1217 = vadd.f32 %v1216, %v1197
        %v1218 = vadd.f32 %v1217, %v1199
        %v1219 = vadd.f32 %v1218, %v1201
        %v1220 = vadd.f32 %v1219, %v1203
        %v1221 = vadd.f32 %v1220, %v1205
        %v1222 = vadd.f32 %v1221, %v1207
        %v1223 = vrot.slane %v1222, 4
        %v1224 = vadd.f32 %v1222, %v1223
        %v1225 = vrot.slane %v1224, 2
        %v1226 = vadd.f32 %v1224, %v1225
        %v1227 = vrot.slane %v1226, 1
        %v1228 = vadd.f32 %v1226, %v1227
        %v1229 = vrcp.pop %v1228
        %v1230 = vmul.f32 %v1177, %v1229
        %v1231 = vmul.f32 %v1179, %v1229
        %v1232 = vmul.f32 %v1181, %v1229
        %v1233 = vmul.f32 %v1183, %v1229
        %v1234 = vmul.f32 %v1185, %v1229
        %v1235 = vmul.f32 %v1187, %v1229
        %v1236 = vmul.f32 %v1189, %v1229
        %v1237 = vmul.f32 %v1191, %v1229
        %v1238 = vmul.f32 %v1193, %v1229
        %v1239 = vmul.f32 %v1195, %v1229
        %v1240 = vmul.f32 %v1197, %v1229
        %v1241 = vmul.f32 %v1199, %v1229
        %v1242 = vmul.f32 %v1201, %v1229
        %v1243 = vmul.f32 %v1203, %v1229
        %v1244 = vmul.f32 %v1205, %v1229
        %v1245 = vmul.f32 %v1207, %v1229
        %v1246 = vpack.c.bf16 %v1231, %v1230
        %v1247 = vpack.c.bf16 %v1233, %v1232
        %v1248 = vpack.c.bf16 %v1235, %v1234
        %v1249 = vpack.c.bf16 %v1237, %v1236
        %v1250 = vpack.c.bf16 %v1239, %v1238
        %v1251 = vpack.c.bf16 %v1241, %v1240
        %v1252 = vpack.c.bf16 %v1243, %v1242
        %v1253 = vpack.c.bf16 %v1245, %v1244
        %1254 = vxpose.xlu0.c.b16.start [1/8] %v1026, 128
        %1255 = vxpose.xlu0.c.b16.cont [2/8] %v1028, 128
        %1256 = vxpose.xlu0.c.b16.cont [3/8] %v1030, 128
        %1257 = vxpose.xlu0.c.b16.cont [4/8] %v1032, 128
        %1258 = vxpose.xlu0.c.b16.cont [5/8] %v1034, 128
        %1259 = vxpose.xlu0.c.b16.cont [6/8] %v1036, 128
        %1260 = vxpose.xlu0.c.b16.cont [7/8] %v1038, 128
        %1261 = vxpose.xlu0.c.b16.end [8/8] %v1040, 128
        %v1262 = vpop.trf.xlu0
        %v1263 = vpop.trf.xlu0
        %v1264 = vpop.trf.xlu0
        %v1265 = vpop.trf.xlu0
        %v1266 = vpop.trf.xlu0
        %v1267 = vpop.trf.xlu0
        %v1268 = vpop.trf.xlu0
        %v1269 = vpop.trf.xlu0
        %1270 = vxpose.xlu0.c.b16.start [1/8] %v1027, 128
        %1271 = vxpose.xlu0.c.b16.cont [2/8] %v1029, 128
        %1272 = vxpose.xlu0.c.b16.cont [3/8] %v1031, 128
        %1273 = vxpose.xlu0.c.b16.cont [4/8] %v1033, 128
        %1274 = vxpose.xlu0.c.b16.cont [5/8] %v1035, 128
        %1275 = vxpose.xlu0.c.b16.cont [6/8] %v1037, 128
        %1276 = vxpose.xlu0.c.b16.cont [7/8] %v1039, 128
        %1277 = vxpose.xlu0.c.b16.end [8/8] %v1041, 128
        %v1278 = vpop.trf.xlu0
        %v1279 = vpop.trf.xlu0
        %v1280 = vpop.trf.xlu0
        %v1281 = vpop.trf.xlu0
        %v1282 = vpop.trf.xlu0
        %v1283 = vpop.trf.xlu0
        %v1284 = vpop.trf.xlu0
        %v1285 = vpop.trf.xlu0
        %1286 = vmatprep.subr.bf16.mxu0 0
        %1287 = vmatpush1.bf16.msra.mxu0 %v1246
        %1288 = vmatprep.subr.bf16.mxu0 0
        %1289 = vmatpush1.bf16.msra.mxu0 %v1247
        %1290 = vmatprep.subr.bf16.mxu0 0
        %1291 = vmatpush1.bf16.msra.mxu0 %v1248
        %1292 = vmatprep.subr.bf16.mxu0 0
        %1293 = vmatpush1.bf16.msra.mxu0 %v1249
        %1294 = vmatprep.subr.bf16.mxu0 0
        %1295 = vmatpush1.bf16.msra.mxu0 %v1250
        %1296 = vmatprep.subr.bf16.mxu0 0
        %1297 = vmatpush1.bf16.msra.mxu0 %v1251
        %1298 = vmatprep.subr.bf16.mxu0 0
        %1299 = vmatpush1.bf16.msra.mxu0 %v1252
        %1300 = vmatprep.subr.bf16.mxu0 0
        %1301 = vmatpush1.bf16.msra.mxu0 %v1253
        %1302 = vmatprep.subr.bf16.mxu0 0
        %1303 = vmatpush1.bf16.msra.mxu0 0
        %1304 = vmatprep.subr.bf16.mxu0 0
        %1305 = vmatpush1.bf16.msra.mxu0 0
        %1306 = vmatprep.subr.bf16.mxu0 0
        %1307 = vmatpush1.bf16.msra.mxu0 0
        %1308 = vmatprep.subr.bf16.mxu0 0
        %1309 = vmatpush1.bf16.msra.mxu0 0
        %1310 = vmatprep.subr.bf16.mxu0 0
        %1311 = vmatpush1.bf16.msra.mxu0 0
        %1312 = vmatprep.subr.bf16.mxu0 0
        %1313 = vmatpush1.bf16.msra.mxu0 0
        %1314 = vmatprep.subr.bf16.mxu0 0
        %1315 = vmatpush1.bf16.msra.mxu0 0
        %1316 = vmatprep.subr.bf16.mxu0 0
        %1317 = vmatpush1.bf16.msra.mxu0 0
        %1318 = vmatprep.mubr.bf16.mxu0 0
        %1319 = vmatmul.mubr.bf16.gmra.mrb[0].mxu0 %v1262
        %v1320 = vpop.f32.mrb[0].mxu0
        %v1321 = vadd.f32 0.0, %v1320
        %v1322 = vpop.f32.mrb[0].mxu0
        %v1323 = vpop.f32.mrb[0].mxu0
        %v1324 = vadd.f32 0.0, %v1323
        %v1325 = vpop.f32.mrb[0].mxu0
        %1326 = vmatprep.mubr.bf16.mxu0 0
        %1327 = vmatmul.mubr.bf16.gmra.mrb[0].mxu0 %v1263
        %v1328 = vpop.f32.mrb[0].mxu0
        %v1329 = vadd.f32 0.0, %v1328
        %v1330 = vpop.f32.mrb[0].mxu0
        %v1331 = vpop.f32.mrb[0].mxu0
        %v1332 = vadd.f32 0.0, %v1331
        %v1333 = vpop.f32.mrb[0].mxu0
        %1334 = vmatprep.mubr.bf16.mxu0 0
        %1335 = vmatmul.mubr.bf16.gmra.mrb[0].mxu0 %v1264
        %v1336 = vpop.f32.mrb[0].mxu0
        %v1337 = vadd.f32 0.0, %v1336
        %v1338 = vpop.f32.mrb[0].mxu0
        %v1339 = vpop.f32.mrb[0].mxu0
        %v1340 = vadd.f32 0.0, %v1339
        %v1341 = vpop.f32.mrb[0].mxu0
        %1342 = vmatprep.mubr.bf16.mxu0 0
        %1343 = vmatmul.mubr.bf16.gmra.mrb[0].mxu0 %v1265
        %v1344 = vpop.f32.mrb[0].mxu0
        %v1345 = vadd.f32 0.0, %v1344
        %v1346 = vpop.f32.mrb[0].mxu0
        %v1347 = vpop.f32.mrb[0].mxu0
        %v1348 = vadd.f32 0.0, %v1347
        %v1349 = vpop.f32.mrb[0].mxu0
        %1350 = vmatprep.mubr.bf16.mxu0 0
        %1351 = vmatmul.mubr.bf16.gmra.mrb[0].mxu0 %v1266
        %v1352 = vpop.f32.mrb[0].mxu0
        %v1353 = vadd.f32 0.0, %v1352
        %v1354 = vpop.f32.mrb[0].mxu0
        %v1355 = vpop.f32.mrb[0].mxu0
        %v1356 = vadd.f32 0.0, %v1355
        %v1357 = vpop.f32.mrb[0].mxu0
        %1358 = vmatprep.mubr.bf16.mxu0 0
        %1359 = vmatmul.mubr.bf16.gmra.mrb[0].mxu0 %v1267
        %v1360 = vpop.f32.mrb[0].mxu0
        %v1361 = vadd.f32 0.0, %v1360
        %v1362 = vpop.f32.mrb[0].mxu0
        %v1363 = vpop.f32.mrb[0].mxu0
        %v1364 = vadd.f32 0.0, %v1363
        %v1365 = vpop.f32.mrb[0].mxu0
        %1366 = vmatprep.mubr.bf16.mxu0 0
        %1367 = vmatmul.mubr.bf16.gmra.mrb[0].mxu0 %v1268
        %v1368 = vpop.f32.mrb[0].mxu0
        %v1369 = vadd.f32 0.0, %v1368
        %v1370 = vpop.f32.mrb[0].mxu0
        %v1371 = vpop.f32.mrb[0].mxu0
        %v1372 = vadd.f32 0.0, %v1371
        %v1373 = vpop.f32.mrb[0].mxu0
        %1374 = vmatprep.mubr.bf16.mxu0 0
        %1375 = vmatmul.mubr.bf16.gmra.mrb[0].mxu0 %v1269
        %v1376 = vpop.f32.mrb[0].mxu0
        %v1377 = vadd.f32 0.0, %v1376
        %v1378 = vpop.f32.mrb[0].mxu0
        %v1379 = vpop.f32.mrb[0].mxu0
        %v1380 = vadd.f32 0.0, %v1379
        %v1381 = vpop.f32.mrb[0].mxu0
        %1382 = vmatprep.mubr.bf16.mxu0 0
        %1383 = vmatmul.mubr.bf16.gmra.mrb[0].mxu0 %v1278
        %v1384 = vpop.f32.mrb[0].mxu0
        %v1385 = vadd.f32 0.0, %v1384
        %v1386 = vpop.f32.mrb[0].mxu0
        %v1387 = vpop.f32.mrb[0].mxu0
        %v1388 = vadd.f32 0.0, %v1387
        %v1389 = vpop.f32.mrb[0].mxu0
        %1390 = vmatprep.mubr.bf16.mxu0 0
        %1391 = vmatmul.mubr.bf16.gmra.mrb[0].mxu0 %v1279
        %v1392 = vpop.f32.mrb[0].mxu0
        %v1393 = vadd.f32 0.0, %v1392
        %v1394 = vpop.f32.mrb[0].mxu0
        %v1395 = vpop.f32.mrb[0].mxu0
        %v1396 = vadd.f32 0.0, %v1395
        %v1397 = vpop.f32.mrb[0].mxu0
        %1398 = vmatprep.mubr.bf16.mxu0 0
        %1399 = vmatmul.mubr.bf16.gmra.mrb[0].mxu0 %v1280
        %v1400 = vpop.f32.mrb[0].mxu0
        %v1401 = vadd.f32 0.0, %v1400
        %v1402 = vpop.f32.mrb[0].mxu0
        %v1403 = vpop.f32.mrb[0].mxu0
        %v1404 = vadd.f32 0.0, %v1403
        %v1405 = vpop.f32.mrb[0].mxu0
        %1406 = vmatprep.mubr.bf16.mxu0 0
        %1407 = vmatmul.mubr.bf16.gmra.mrb[0].mxu0 %v1281
        %v1408 = vpop.f32.mrb[0].mxu0
        %v1409 = vadd.f32 0.0, %v1408
        %v1410 = vpop.f32.mrb[0].mxu0
        %v1411 = vpop.f32.mrb[0].mxu0
        %v1412 = vadd.f32 0.0, %v1411
        %v1413 = vpop.f32.mrb[0].mxu0
        %1414 = vmatprep.mubr.bf16.mxu0 0
        %1415 = vmatmul.mubr.bf16.gmra.mrb[0].mxu0 %v1282
        %v1416 = vpop.f32.mrb[0].mxu0
        %v1417 = vadd.f32 0.0, %v1416
        %v1418 = vpop.f32.mrb[0].mxu0
        %v1419 = vpop.f32.mrb[0].mxu0
        %v1420 = vadd.f32 0.0, %v1419
        %v1421 = vpop.f32.mrb[0].mxu0
        %1422 = vmatprep.mubr.bf16.mxu0 0
        %1423 = vmatmul.mubr.bf16.gmra.mrb[0].mxu0 %v1283
        %v1424 = vpop.f32.mrb[0].mxu0
        %v1425 = vadd.f32 0.0, %v1424
        %v1426 = vpop.f32.mrb[0].mxu0
        %v1427 = vpop.f32.mrb[0].mxu0
        %v1428 = vadd.f32 0.0, %v1427
        %v1429 = vpop.f32.mrb[0].mxu0
        %1430 = vmatprep.mubr.bf16.mxu0 0
        %1431 = vmatmul.mubr.bf16.gmra.mrb[0].mxu0 %v1284
        %v1432 = vpop.f32.mrb[0].mxu0
        %v1433 = vadd.f32 0.0, %v1432
        %v1434 = vpop.f32.mrb[0].mxu0
        %v1435 = vpop.f32.mrb[0].mxu0
        %v1436 = vadd.f32 0.0, %v1435
        %v1437 = vpop.f32.mrb[0].mxu0
        %1438 = vmatprep.mubr.bf16.mxu0 0
        %1439 = vmatmul.mubr.bf16.gmra.mrb[0].mxu0 %v1285
        %v1440 = vpop.f32.mrb[0].mxu0
        %v1441 = vadd.f32 0.0, %v1440
        %v1442 = vpop.f32.mrb[0].mxu0
        %v1443 = vpop.f32.mrb[0].mxu0
        %v1444 = vadd.f32 0.0, %v1443
        %v1445 = vpop.f32.mrb[0].mxu0
        %1446 = vdwg.mxu0
        %1447 = vst [vmem:[%s189] sm:$0xff] %v1321
        %1448 = vst [vmem:[%s189 + $0x8] sm:$0xff] %v1324
        %1449 = vst [vmem:[%s189 + $0x10] sm:$0xff] %v1329
        %1450 = vst [vmem:[%s189 + $0x18] sm:$0xff] %v1332
        %1451 = vst [vmem:[%s189 + $0x20] sm:$0xff] %v1337
        %1452 = vst [vmem:[%s189 + $0x28] sm:$0xff] %v1340
        %1453 = vst [vmem:[%s189 + $0x30] sm:$0xff] %v1345
        %1454 = vst [vmem:[%s189 + $0x38] sm:$0xff] %v1348
        %1455 = vst [vmem:[%s189 + $0x40] sm:$0xff] %v1353
        %1456 = vst [vmem:[%s189 + $0x48] sm:$0xff] %v1356
        %1457 = vst [vmem:[%s189 + $0x50] sm:$0xff] %v1361
        %1458 = vst [vmem:[%s189 + $0x58] sm:$0xff] %v1364
        %1459 = vst [vmem:[%s189 + $0x60] sm:$0xff] %v1369
        %1460 = vst [vmem:[%s189 + $0x68] sm:$0xff] %v1372
        %1461 = vst [vmem:[%s189 + $0x70] sm:$0xff] %v1377
        %1462 = vst [vmem:[%s189 + $0x78] sm:$0xff] %v1380
        %1463 = vst [vmem:[%s189 + $0x80] sm:$0xff] %v1385
        %1464 = vst [vmem:[%s189 + $0x88] sm:$0xff] %v1388
        %1465 = vst [vmem:[%s189 + $0x90] sm:$0xff] %v1393
        %1466 = vst [vmem:[%s189 + $0x98] sm:$0xff] %v1396
        %1467 = vst [vmem:[%s189 + $0xa0] sm:$0xff] %v1401
        %1468 = vst [vmem:[%s189 + $0xa8] sm:$0xff] %v1404
        %1469 = vst [vmem:[%s189 + $0xb0] sm:$0xff] %v1409
        %1470 = vst [vmem:[%s189 + $0xb8] sm:$0xff] %v1412
        %1471 = vst [vmem:[%s189 + $0xc0] sm:$0xff] %v1417
        %1472 = vst [vmem:[%s189 + $0xc8] sm:$0xff] %v1420
        %1473 = vst [vmem:[%s189 + $0xd0] sm:$0xff] %v1425
        %1474 = vst [vmem:[%s189 + $0xd8] sm:$0xff] %v1428
        %1475 = vst [vmem:[%s189 + $0xe0] sm:$0xff] %v1433
        %1476 = vst [vmem:[%s189 + $0xe8] sm:$0xff] %v1436
        %1477 = vst [vmem:[%s189 + $0xf0] sm:$0xff] %v1441
        %1478 = vst [vmem:[%s189 + $0xf8] sm:$0xff] %v1444
        %s1479 = scalar_lea.vmem %s167, 256 [#allocation2]
        %v1480 = vld [vmem:[%s1479] sm:$0xff]
        %v1481 = vld [vmem:[%s1479 + $0x8] sm:$0xff]
        %v1482 = vld [vmem:[%s1479 + $0x10] sm:$0xff]
        %v1483 = vld [vmem:[%s1479 + $0x18] sm:$0xff]
        %v1484 = vld [vmem:[%s1479 + $0x20] sm:$0xff]
        %v1485 = vld [vmem:[%s1479 + $0x28] sm:$0xff]
        %v1486 = vld [vmem:[%s1479 + $0x30] sm:$0xff]
        %v1487 = vld [vmem:[%s1479 + $0x38] sm:$0xff]
        %v1488 = vld [vmem:[%s1479 + $0x40] sm:$0xff]
        %v1489 = vld [vmem:[%s1479 + $0x48] sm:$0xff]
        %v1490 = vld [vmem:[%s1479 + $0x50] sm:$0xff]
        %v1491 = vld [vmem:[%s1479 + $0x58] sm:$0xff]
        %v1492 = vld [vmem:[%s1479 + $0x60] sm:$0xff]
        %v1493 = vld [vmem:[%s1479 + $0x68] sm:$0xff]
        %v1494 = vld [vmem:[%s1479 + $0x70] sm:$0xff]
        %v1495 = vld [vmem:[%s1479 + $0x78] sm:$0xff]
        %v1496 = vld [vmem:[%s1479 + $0x80] sm:$0xff]
        %v1497 = vld [vmem:[%s1479 + $0x88] sm:$0xff]
        %v1498 = vld [vmem:[%s1479 + $0x90] sm:$0xff]
        %v1499 = vld [vmem:[%s1479 + $0x98] sm:$0xff]
        %v1500 = vld [vmem:[%s1479 + $0xa0] sm:$0xff]
        %v1501 = vld [vmem:[%s1479 + $0xa8] sm:$0xff]
        %v1502 = vld [vmem:[%s1479 + $0xb0] sm:$0xff]
        %v1503 = vld [vmem:[%s1479 + $0xb8] sm:$0xff]
        %v1504 = vld [vmem:[%s1479 + $0xc0] sm:$0xff]
        %v1505 = vld [vmem:[%s1479 + $0xc8] sm:$0xff]
        %v1506 = vld [vmem:[%s1479 + $0xd0] sm:$0xff]
        %v1507 = vld [vmem:[%s1479 + $0xd8] sm:$0xff]
        %v1508 = vld [vmem:[%s1479 + $0xe0] sm:$0xff]
        %v1509 = vld [vmem:[%s1479 + $0xe8] sm:$0xff]
        %v1510 = vld [vmem:[%s1479 + $0xf0] sm:$0xff]
        %v1511 = vld [vmem:[%s1479 + $0xf8] sm:$0xff]
        %v1512 = vpack.c.bf16 %v1482, %v1480
        %v1513 = vpack.c.bf16 %v1483, %v1481
        %v1514 = vpack.c.bf16 %v1486, %v1484
        %v1515 = vpack.c.bf16 %v1487, %v1485
        %v1516 = vpack.c.bf16 %v1490, %v1488
        %v1517 = vpack.c.bf16 %v1491, %v1489
        %v1518 = vpack.c.bf16 %v1494, %v1492
        %v1519 = vpack.c.bf16 %v1495, %v1493
        %v1520 = vpack.c.bf16 %v1498, %v1496
        %v1521 = vpack.c.bf16 %v1499, %v1497
        %v1522 = vpack.c.bf16 %v1502, %v1500
        %v1523 = vpack.c.bf16 %v1503, %v1501
        %v1524 = vpack.c.bf16 %v1506, %v1504
        %v1525 = vpack.c.bf16 %v1507, %v1505
        %v1526 = vpack.c.bf16 %v1510, %v1508
        %v1527 = vpack.c.bf16 %v1511, %v1509
        %1528 = vmatprep.subr.bf16.mxu0 %v1513
        %1529 = vmatpush1.bf16.msra.mxu0 %v1512
        %1530 = vmatprep.subr.bf16.mxu0 %v1515
        %1531 = vmatpush1.bf16.msra.mxu0 %v1514
        %1532 = vmatprep.subr.bf16.mxu0 %v1517
        %1533 = vmatpush1.bf16.msra.mxu0 %v1516
        %1534 = vmatprep.subr.bf16.mxu0 %v1519
        %1535 = vmatpush1.bf16.msra.mxu0 %v1518
        %1536 = vmatprep.subr.bf16.mxu0 %v1521
        %1537 = vmatpush1.bf16.msra.mxu0 %v1520
        %1538 = vmatprep.subr.bf16.mxu0 %v1523
        %1539 = vmatpush1.bf16.msra.mxu0 %v1522
        %1540 = vmatprep.subr.bf16.mxu0 %v1525
        %1541 = vmatpush1.bf16.msra.mxu0 %v1524
        %1542 = vmatprep.subr.bf16.mxu0 %v1527
        %1543 = vmatpush1.bf16.msra.mxu0 %v1526
        %1544 = vmatprep.subr.bf16.mxu0 0
        %1545 = vmatpush1.bf16.msra.mxu0 0
        %1546 = vmatprep.subr.bf16.mxu0 0
        %1547 = vmatpush1.bf16.msra.mxu0 0
        %1548 = vmatprep.subr.bf16.mxu0 0
        %1549 = vmatpush1.bf16.msra.mxu0 0
        %1550 = vmatprep.subr.bf16.mxu0 0
        %1551 = vmatpush1.bf16.msra.mxu0 0
        %1552 = vmatprep.subr.bf16.mxu0 0
        %1553 = vmatpush1.bf16.msra.mxu0 0
        %1554 = vmatprep.subr.bf16.mxu0 0
        %1555 = vmatpush1.bf16.msra.mxu0 0
        %1556 = vmatprep.subr.bf16.mxu0 0
        %1557 = vmatpush1.bf16.msra.mxu0 0
        %1558 = vmatprep.subr.bf16.mxu0 0
        %1559 = vmatpush1.bf16.msra.mxu0 0
        %1560 = vmatprep.mubr.bf16.mxu0 0
        %1561 = vmatmul.mubr.bf16.gmra.mrb[0].mxu0 %v673
        %v1562 = vpop.f32.mrb[0].mxu0
        %v1563 = vadd.f32 %v340, %v1562
        %v1564 = vpop.f32.mrb[0].mxu0
        %v1565 = vadd.f32 %v340, %v1564
        %v1566 = vpop.f32.mrb[0].mxu0
        %v1567 = vadd.f32 %v345, %v1566
        %v1568 = vpop.f32.mrb[0].mxu0
        %v1569 = vadd.f32 %v345, %v1568
        %1570 = vmatprep.mubr.bf16.mxu0 0
        %1571 = vmatmul.mubr.bf16.gmra.mrb[0].mxu0 %v674
        %v1572 = vpop.f32.mrb[0].mxu0
        %v1573 = vadd.f32 %v350, %v1572
        %v1574 = vpop.f32.mrb[0].mxu0
        %v1575 = vadd.f32 %v350, %v1574
        %v1576 = vpop.f32.mrb[0].mxu0
        %v1577 = vadd.f32 %v355, %v1576
        %v1578 = vpop.f32.mrb[0].mxu0
        %v1579 = vadd.f32 %v355, %v1578
        %1580 = vmatprep.mubr.bf16.mxu0 0
        %1581 = vmatmul.mubr.bf16.gmra.mrb[0].mxu0 %v675
        %v1582 = vpop.f32.mrb[0].mxu0
        %v1583 = vadd.f32 %v360, %v1582
        %v1584 = vpop.f32.mrb[0].mxu0
        %v1585 = vadd.f32 %v360, %v1584
        %v1586 = vpop.f32.mrb[0].mxu0
        %v1587 = vadd.f32 %v365, %v1586
        %v1588 = vpop.f32.mrb[0].mxu0
        %v1589 = vadd.f32 %v365, %v1588
        %1590 = vmatprep.mubr.bf16.mxu0 0
        %1591 = vmatmul.mubr.bf16.gmra.mrb[0].mxu0 %v676
        %v1592 = vpop.f32.mrb[0].mxu0
        %v1593 = vadd.f32 %v370, %v1592
        %v1594 = vpop.f32.mrb[0].mxu0
        %v1595 = vadd.f32 %v370, %v1594
        %v1596 = vpop.f32.mrb[0].mxu0
        %v1597 = vadd.f32 %v375, %v1596
        %v1598 = vpop.f32.mrb[0].mxu0
        %v1599 = vadd.f32 %v375, %v1598
        %1600 = vmatprep.mubr.bf16.mxu0 0
        %1601 = vmatmul.mubr.bf16.gmra.mrb[0].mxu0 %v677
        %v1602 = vpop.f32.mrb[0].mxu0
        %v1603 = vadd.f32 %v380, %v1602
        %v1604 = vpop.f32.mrb[0].mxu0
        %v1605 = vadd.f32 %v380, %v1604
        %v1606 = vpop.f32.mrb[0].mxu0
        %v1607 = vadd.f32 %v385, %v1606
        %v1608 = vpop.f32.mrb[0].mxu0
        %v1609 = vadd.f32 %v385, %v1608
        %1610 = vmatprep.mubr.bf16.mxu0 0
        %1611 = vmatmul.mubr.bf16.gmra.mrb[0].mxu0 %v678
        %v1612 = vpop.f32.mrb[0].mxu0
        %v1613 = vadd.f32 %v390, %v1612
        %v1614 = vpop.f32.mrb[0].mxu0
        %v1615 = vadd.f32 %v390, %v1614
        %v1616 = vpop.f32.mrb[0].mxu0
        %v1617 = vadd.f32 %v395, %v1616
        %v1618 = vpop.f32.mrb[0].mxu0
        %v1619 = vadd.f32 %v395, %v1618
        %1620 = vmatprep.mubr.bf16.mxu0 0
        %1621 = vmatmul.mubr.bf16.gmra.mrb[0].mxu0 %v679
        %v1622 = vpop.f32.mrb[0].mxu0
        %v1623 = vadd.f32 %v400, %v1622
        %v1624 = vpop.f32.mrb[0].mxu0
        %v1625 = vadd.f32 %v400, %v1624
        %v1626 = vpop.f32.mrb[0].mxu0
        %v1627 = vadd.f32 %v405, %v1626
        %v1628 = vpop.f32.mrb[0].mxu0
        %v1629 = vadd.f32 %v405, %v1628
        %1630 = vmatprep.mubr.bf16.mxu0 0
        %1631 = vmatmul.mubr.bf16.gmra.mrb[0].mxu0 %v680
        %v1632 = vpop.f32.mrb[0].mxu0
        %v1633 = vadd.f32 %v410, %v1632
        %v1634 = vpop.f32.mrb[0].mxu0
        %v1635 = vadd.f32 %v410, %v1634
        %v1636 = vpop.f32.mrb[0].mxu0
        %v1637 = vadd.f32 %v415, %v1636
        %v1638 = vpop.f32.mrb[0].mxu0
        %v1639 = vadd.f32 %v415, %v1638
        %1640 = vmatprep.mubr.bf16.mxu0 0
        %1641 = vmatmul.mubr.bf16.gmra.mrb[0].mxu0 %v681
        %v1642 = vpop.f32.mrb[0].mxu0
        %v1643 = vadd.f32 %v420, %v1642
        %v1644 = vpop.f32.mrb[0].mxu0
        %v1645 = vadd.f32 %v420, %v1644
        %v1646 = vpop.f32.mrb[0].mxu0
        %v1647 = vadd.f32 %v425, %v1646
        %v1648 = vpop.f32.mrb[0].mxu0
        %v1649 = vadd.f32 %v425, %v1648
        %1650 = vmatprep.mubr.bf16.mxu0 0
        %1651 = vmatmul.mubr.bf16.gmra.mrb[0].mxu0 %v682
        %v1652 = vpop.f32.mrb[0].mxu0
        %v1653 = vadd.f32 %v430, %v1652
        %v1654 = vpop.f32.mrb[0].mxu0
        %v1655 = vadd.f32 %v430, %v1654
        %v1656 = vpop.f32.mrb[0].mxu0
        %v1657 = vadd.f32 %v435, %v1656
        %v1658 = vpop.f32.mrb[0].mxu0
        %v1659 = vadd.f32 %v435, %v1658
        %1660 = vmatprep.mubr.bf16.mxu0 0
        %1661 = vmatmul.mubr.bf16.gmra.mrb[0].mxu0 %v683
        %v1662 = vpop.f32.mrb[0].mxu0
        %v1663 = vadd.f32 %v440, %v1662
        %v1664 = vpop.f32.mrb[0].mxu0
        %v1665 = vadd.f32 %v440, %v1664
        %v1666 = vpop.f32.mrb[0].mxu0
        %v1667 = vadd.f32 %v445, %v1666
        %v1668 = vpop.f32.mrb[0].mxu0
        %v1669 = vadd.f32 %v445, %v1668
        %1670 = vmatprep.mubr.bf16.mxu0 0
        %1671 = vmatmul.mubr.bf16.gmra.mrb[0].mxu0 %v684
        %v1672 = vpop.f32.mrb[0].mxu0
        %v1673 = vadd.f32 %v450, %v1672
        %v1674 = vpop.f32.mrb[0].mxu0
        %v1675 = vadd.f32 %v450, %v1674
        %v1676 = vpop.f32.mrb[0].mxu0
        %v1677 = vadd.f32 %v455, %v1676
        %v1678 = vpop.f32.mrb[0].mxu0
        %v1679 = vadd.f32 %v455, %v1678
        %1680 = vmatprep.mubr.bf16.mxu0 0
        %1681 = vmatmul.mubr.bf16.gmra.mrb[0].mxu0 %v685
        %v1682 = vpop.f32.mrb[0].mxu0
        %v1683 = vadd.f32 %v460, %v1682
        %v1684 = vpop.f32.mrb[0].mxu0
        %v1685 = vadd.f32 %v460, %v1684
        %v1686 = vpop.f32.mrb[0].mxu0
        %v1687 = vadd.f32 %v465, %v1686
        %v1688 = vpop.f32.mrb[0].mxu0
        %v1689 = vadd.f32 %v465, %v1688
        %1690 = vmatprep.mubr.bf16.mxu0 0
        %1691 = vmatmul.mubr.bf16.gmra.mrb[0].mxu0 %v686
        %v1692 = vpop.f32.mrb[0].mxu0
        %v1693 = vadd.f32 %v470, %v1692
        %v1694 = vpop.f32.mrb[0].mxu0
        %v1695 = vadd.f32 %v470, %v1694
        %v1696 = vpop.f32.mrb[0].mxu0
        %v1697 = vadd.f32 %v475, %v1696
        %v1698 = vpop.f32.mrb[0].mxu0
        %v1699 = vadd.f32 %v475, %v1698
        %1700 = vmatprep.mubr.bf16.mxu0 0
        %1701 = vmatmul.mubr.bf16.gmra.mrb[0].mxu0 %v687
        %v1702 = vpop.f32.mrb[0].mxu0
        %v1703 = vadd.f32 %v480, %v1702
        %v1704 = vpop.f32.mrb[0].mxu0
        %v1705 = vadd.f32 %v480, %v1704
        %v1706 = vpop.f32.mrb[0].mxu0
        %v1707 = vadd.f32 %v485, %v1706
        %v1708 = vpop.f32.mrb[0].mxu0
        %v1709 = vadd.f32 %v485, %v1708
        %1710 = vmatprep.mubr.bf16.mxu0 0
        %1711 = vmatmul.mubr.bf16.gmra.mrb[0].mxu0 %v688
        %v1712 = vpop.f32.mrb[0].mxu0
        %v1713 = vadd.f32 %v490, %v1712
        %v1714 = vpop.f32.mrb[0].mxu0
        %v1715 = vadd.f32 %v490, %v1714
        %v1716 = vpop.f32.mrb[0].mxu0
        %v1717 = vadd.f32 %v495, %v1716
        %v1718 = vpop.f32.mrb[0].mxu0
        %v1719 = vadd.f32 %v495, %v1718
        %1720 = vmatprep.mubr.bf16.mxu0 0
        %1721 = vmatmul.mubr.bf16.gmra.mrb[0].mxu0 %v689
        %v1722 = vpop.f32.mrb[0].mxu0
        %v1723 = vadd.f32 %v500, %v1722
        %v1724 = vpop.f32.mrb[0].mxu0
        %v1725 = vadd.f32 %v500, %v1724
        %v1726 = vpop.f32.mrb[0].mxu0
        %v1727 = vadd.f32 %v505, %v1726
        %v1728 = vpop.f32.mrb[0].mxu0
        %v1729 = vadd.f32 %v505, %v1728
        %1730 = vmatprep.mubr.bf16.mxu0 0
        %1731 = vmatmul.mubr.bf16.gmra.mrb[0].mxu0 %v690
        %v1732 = vpop.f32.mrb[0].mxu0
        %v1733 = vadd.f32 %v510, %v1732
        %v1734 = vpop.f32.mrb[0].mxu0
        %v1735 = vadd.f32 %v510, %v1734
        %v1736 = vpop.f32.mrb[0].mxu0
        %v1737 = vadd.f32 %v515, %v1736
        %v1738 = vpop.f32.mrb[0].mxu0
        %v1739 = vadd.f32 %v515, %v1738
        %1740 = vmatprep.mubr.bf16.mxu0 0
        %1741 = vmatmul.mubr.bf16.gmra.mrb[0].mxu0 %v691
        %v1742 = vpop.f32.mrb[0].mxu0
        %v1743 = vadd.f32 %v520, %v1742
        %v1744 = vpop.f32.mrb[0].mxu0
        %v1745 = vadd.f32 %v520, %v1744
        %v1746 = vpop.f32.mrb[0].mxu0
        %v1747 = vadd.f32 %v525, %v1746
        %v1748 = vpop.f32.mrb[0].mxu0
        %v1749 = vadd.f32 %v525, %v1748
        %1750 = vmatprep.mubr.bf16.mxu0 0
        %1751 = vmatmul.mubr.bf16.gmra.mrb[0].mxu0 %v692
        %v1752 = vpop.f32.mrb[0].mxu0
        %v1753 = vadd.f32 %v530, %v1752
        %v1754 = vpop.f32.mrb[0].mxu0
        %v1755 = vadd.f32 %v530, %v1754
        %v1756 = vpop.f32.mrb[0].mxu0
        %v1757 = vadd.f32 %v535, %v1756
        %v1758 = vpop.f32.mrb[0].mxu0
        %v1759 = vadd.f32 %v535, %v1758
        %1760 = vmatprep.mubr.bf16.mxu0 0
        %1761 = vmatmul.mubr.bf16.gmra.mrb[0].mxu0 %v693
        %v1762 = vpop.f32.mrb[0].mxu0
        %v1763 = vadd.f32 %v540, %v1762
        %v1764 = vpop.f32.mrb[0].mxu0
        %v1765 = vadd.f32 %v540, %v1764
        %v1766 = vpop.f32.mrb[0].mxu0
        %v1767 = vadd.f32 %v545, %v1766
        %v1768 = vpop.f32.mrb[0].mxu0
        %v1769 = vadd.f32 %v545, %v1768
        %1770 = vmatprep.mubr.bf16.mxu0 0
        %1771 = vmatmul.mubr.bf16.gmra.mrb[0].mxu0 %v694
        %v1772 = vpop.f32.mrb[0].mxu0
        %v1773 = vadd.f32 %v550, %v1772
        %v1774 = vpop.f32.mrb[0].mxu0
        %v1775 = vadd.f32 %v550, %v1774
        %v1776 = vpop.f32.mrb[0].mxu0
        %v1777 = vadd.f32 %v555, %v1776
        %v1778 = vpop.f32.mrb[0].mxu0
        %v1779 = vadd.f32 %v555, %v1778
        %1780 = vmatprep.mubr.bf16.mxu0 0
        %1781 = vmatmul.mubr.bf16.gmra.mrb[0].mxu0 %v695
        %v1782 = vpop.f32.mrb[0].mxu0
        %v1783 = vadd.f32 %v560, %v1782
        %v1784 = vpop.f32.mrb[0].mxu0
        %v1785 = vadd.f32 %v560, %v1784
        %v1786 = vpop.f32.mrb[0].mxu0
        %v1787 = vadd.f32 %v565, %v1786
        %v1788 = vpop.f32.mrb[0].mxu0
        %v1789 = vadd.f32 %v565, %v1788
        %1790 = vmatprep.mubr.bf16.mxu0 0
        %1791 = vmatmul.mubr.bf16.gmra.mrb[0].mxu0 %v696
        %v1792 = vpop.f32.mrb[0].mxu0
        %v1793 = vadd.f32 %v570, %v1792
        %v1794 = vpop.f32.mrb[0].mxu0
        %v1795 = vadd.f32 %v570, %v1794
        %v1796 = vpop.f32.mrb[0].mxu0
        %v1797 = vadd.f32 %v575, %v1796
        %v1798 = vpop.f32.mrb[0].mxu0
        %v1799 = vadd.f32 %v575, %v1798
        %1800 = vdwg.mxu0
        %v1801 = vpack.c.bf16 %v1567, %v1563
        %v1802 = vpack.c.bf16 %v1569, %v1565
        %v1803 = vpack.c.bf16 %v1577, %v1573
        %v1804 = vpack.c.bf16 %v1579, %v1575
        %v1805 = vpack.c.bf16 %v1587, %v1583
        %v1806 = vpack.c.bf16 %v1589, %v1585
        %v1807 = vpack.c.bf16 %v1597, %v1593
        %v1808 = vpack.c.bf16 %v1599, %v1595
        %v1809 = vpack.c.bf16 %v1607, %v1603
        %v1810 = vpack.c.bf16 %v1609, %v1605
        %v1811 = vpack.c.bf16 %v1617, %v1613
        %v1812 = vpack.c.bf16 %v1619, %v1615
        %v1813 = vpack.c.bf16 %v1627, %v1623
        %v1814 = vpack.c.bf16 %v1629, %v1625
        %v1815 = vpack.c.bf16 %v1637, %v1633
        %v1816 = vpack.c.bf16 %v1639, %v1635
        %v1817 = vpack.c.bf16 %v1647, %v1643
        %v1818 = vpack.c.bf16 %v1649, %v1645
        %v1819 = vpack.c.bf16 %v1657, %v1653
        %v1820 = vpack.c.bf16 %v1659, %v1655
        %v1821 = vpack.c.bf16 %v1667, %v1663
        %v1822 = vpack.c.bf16 %v1669, %v1665
        %v1823 = vpack.c.bf16 %v1677, %v1673
        %v1824 = vpack.c.bf16 %v1679, %v1675
        %v1825 = vpack.c.bf16 %v1687, %v1683
        %v1826 = vpack.c.bf16 %v1689, %v1685
        %v1827 = vpack.c.bf16 %v1697, %v1693
        %v1828 = vpack.c.bf16 %v1699, %v1695
        %v1829 = vpack.c.bf16 %v1707, %v1703
        %v1830 = vpack.c.bf16 %v1709, %v1705
        %v1831 = vpack.c.bf16 %v1717, %v1713
        %v1832 = vpack.c.bf16 %v1719, %v1715
        %v1833 = vpack.c.bf16 %v1727, %v1723
        %v1834 = vpack.c.bf16 %v1729, %v1725
        %v1835 = vpack.c.bf16 %v1737, %v1733
        %v1836 = vpack.c.bf16 %v1739, %v1735
        %v1837 = vpack.c.bf16 %v1747, %v1743
        %v1838 = vpack.c.bf16 %v1749, %v1745
        %v1839 = vpack.c.bf16 %v1757, %v1753
        %v1840 = vpack.c.bf16 %v1759, %v1755
        %v1841 = vpack.c.bf16 %v1767, %v1763
        %v1842 = vpack.c.bf16 %v1769, %v1765
        %v1843 = vpack.c.bf16 %v1777, %v1773
        %v1844 = vpack.c.bf16 %v1779, %v1775
        %v1845 = vpack.c.bf16 %v1787, %v1783
        %v1846 = vpack.c.bf16 %v1789, %v1785
        %v1847 = vpack.c.bf16 %v1797, %v1793
        %v1848 = vpack.c.bf16 %v1799, %v1795
        %1849 = vmatprep.subr.bf16.mxu0 %v1818
        %1850 = vmatpush1.bf16.xpose.msra.mxu0 %v1817
        %1851 = vmatprep.subr.bf16.mxu0 %v1820
        %1852 = vmatpush1.bf16.xpose.msra.mxu0 %v1819
        %1853 = vmatprep.subr.bf16.mxu0 %v1822
        %1854 = vmatpush1.bf16.xpose.msra.mxu0 %v1821
        %1855 = vmatprep.subr.bf16.mxu0 %v1824
        %1856 = vmatpush1.bf16.xpose.msra.mxu0 %v1823
        %1857 = vmatprep.subr.bf16.mxu0 %v1826
        %1858 = vmatpush1.bf16.xpose.msra.mxu0 %v1825
        %1859 = vmatprep.subr.bf16.mxu0 %v1828
        %1860 = vmatpush1.bf16.xpose.msra.mxu0 %v1827
        %1861 = vmatprep.subr.bf16.mxu0 %v1830
        %1862 = vmatpush1.bf16.xpose.msra.mxu0 %v1829
        %1863 = vmatprep.subr.bf16.mxu0 %v1832
        %1864 = vmatpush1.bf16.xpose.msra.mxu0 %v1831
        %1865 = vmatprep.subr.bf16.mxu0 0
        %1866 = vmatpush1.bf16.xpose.msra.mxu0 0
        %1867 = vmatprep.subr.bf16.mxu0 0
        %1868 = vmatpush1.bf16.xpose.msra.mxu0 0
        %1869 = vmatprep.subr.bf16.mxu0 0
        %1870 = vmatpush1.bf16.xpose.msra.mxu0 0
        %1871 = vmatprep.subr.bf16.mxu0 0
        %1872 = vmatpush1.bf16.xpose.msra.mxu0 0
        %1873 = vmatprep.subr.bf16.mxu0 0
        %1874 = vmatpush1.bf16.xpose.msra.mxu0 0
        %1875 = vmatprep.subr.bf16.mxu0 0
        %1876 = vmatpush1.bf16.xpose.msra.mxu0 0
        %1877 = vmatprep.subr.bf16.mxu0 0
        %1878 = vmatpush1.bf16.xpose.msra.mxu0 0
        %1879 = vmatprep.subr.bf16.mxu0 0
        %1880 = vmatpush1.bf16.xpose.msra.mxu0 0
        %1881 = vmatprep.mubr.bf16.mxu0 %v1802
        %1882 = vmatmul.mubr.bf16.gmra.mrb[0].mxu0 %v1801
        %v1883 = vpop.f32.mrb[0].mxu0
        %v1884 = vadd.f32 0.0, %v1883
        %v1885 = vpop.f32.mrb[0].mxu0
        %v1886 = vpop.f32.mrb[0].mxu0
        %v1887 = vadd.f32 0.0, %v1886
        %v1888 = vpop.f32.mrb[0].mxu0
        %1889 = vmatprep.mubr.bf16.mxu0 %v1804
        %1890 = vmatmul.mubr.bf16.gmra.mrb[0].mxu0 %v1803
        %v1891 = vpop.f32.mrb[0].mxu0
        %v1892 = vadd.f32 0.0, %v1891
        %v1893 = vpop.f32.mrb[0].mxu0
        %v1894 = vpop.f32.mrb[0].mxu0
        %v1895 = vadd.f32 0.0, %v1894
        %v1896 = vpop.f32.mrb[0].mxu0
        %1897 = vmatprep.mubr.bf16.mxu0 %v1806
        %1898 = vmatmul.mubr.bf16.gmra.mrb[0].mxu0 %v1805
        %v1899 = vpop.f32.mrb[0].mxu0
        %v1900 = vadd.f32 0.0, %v1899
        %v1901 = vpop.f32.mrb[0].mxu0
        %v1902 = vpop.f32.mrb[0].mxu0
        %v1903 = vadd.f32 0.0, %v1902
        %v1904 = vpop.f32.mrb[0].mxu0
        %1905 = vmatprep.mubr.bf16.mxu0 %v1808
        %1906 = vmatmul.mubr.bf16.gmra.mrb[0].mxu0 %v1807
        %v1907 = vpop.f32.mrb[0].mxu0
        %v1908 = vadd.f32 0.0, %v1907
        %v1909 = vpop.f32.mrb[0].mxu0
        %v1910 = vpop.f32.mrb[0].mxu0
        %v1911 = vadd.f32 0.0, %v1910
        %v1912 = vpop.f32.mrb[0].mxu0
        %1913 = vmatprep.mubr.bf16.mxu0 %v1810
        %1914 = vmatmul.mubr.bf16.gmra.mrb[0].mxu0 %v1809
        %v1915 = vpop.f32.mrb[0].mxu0
        %v1916 = vadd.f32 0.0, %v1915
        %v1917 = vpop.f32.mrb[0].mxu0
        %v1918 = vpop.f32.mrb[0].mxu0
        %v1919 = vadd.f32 0.0, %v1918
        %v1920 = vpop.f32.mrb[0].mxu0
        %1921 = vmatprep.mubr.bf16.mxu0 %v1812
        %1922 = vmatmul.mubr.bf16.gmra.mrb[0].mxu0 %v1811
        %v1923 = vpop.f32.mrb[0].mxu0
        %v1924 = vadd.f32 0.0, %v1923
        %v1925 = vpop.f32.mrb[0].mxu0
        %v1926 = vpop.f32.mrb[0].mxu0
        %v1927 = vadd.f32 0.0, %v1926
        %v1928 = vpop.f32.mrb[0].mxu0
        %1929 = vmatprep.mubr.bf16.mxu0 %v1814
        %1930 = vmatmul.mubr.bf16.gmra.mrb[0].mxu0 %v1813
        %v1931 = vpop.f32.mrb[0].mxu0
        %v1932 = vadd.f32 0.0, %v1931
        %v1933 = vpop.f32.mrb[0].mxu0
        %v1934 = vpop.f32.mrb[0].mxu0
        %v1935 = vadd.f32 0.0, %v1934
        %v1936 = vpop.f32.mrb[0].mxu0
        %1937 = vmatprep.mubr.bf16.mxu0 %v1816
        %1938 = vmatmul.mubr.bf16.gmra.mrb[0].mxu0 %v1815
        %v1939 = vpop.f32.mrb[0].mxu0
        %v1940 = vadd.f32 0.0, %v1939
        %v1941 = vpop.f32.mrb[0].mxu0
        %v1942 = vpop.f32.mrb[0].mxu0
        %v1943 = vadd.f32 0.0, %v1942
        %v1944 = vpop.f32.mrb[0].mxu0
        %1945 = vdwg.mxu0
        %v1946 = vmax.f32 %v1884, %v1900
        %v1947 = vmax.f32 %v1887, %v1903
        %v1948 = vmax.f32 %v1892, %v1908
        %v1949 = vmax.f32 %v1895, %v1911
        %v1950 = vmax.f32 %v1946, %v1916
        %v1951 = vmax.f32 %v1947, %v1919
        %v1952 = vmax.f32 %v1948, %v1924
        %v1953 = vmax.f32 %v1949, %v1927
        %v1954 = vmax.f32 %v1950, %v1932
        %v1955 = vmax.f32 %v1951, %v1935
        %v1956 = vmax.f32 %v1952, %v1940
        %v1957 = vmax.f32 %v1953, %v1943
        %v1958 = vmax.f32 %v1954, %v1955
        %v1959 = vmax.f32 %v1956, %v1957
        %v1960 = vmax.f32 %v1958, %v1959
        %v1961 = vrot.slane %v1960, 4
        %v1962 = vmax.f32 %v1960, %v1961
        %v1963 = vrot.slane %v1962, 2
        %v1964 = vmax.f32 %v1962, %v1963
        %v1965 = vrot.slane %v1964, 1
        %v1966 = vmax.f32 %v1964, %v1965
        %v1967 = vsub.f32 %v1884, %v1966
        %v1968 = vsub.f32 %v1887, %v1966
        %v1969 = vsub.f32 %v1892, %v1966
        %v1970 = vsub.f32 %v1895, %v1966
        %v1971 = vsub.f32 %v1900, %v1966
        %v1972 = vsub.f32 %v1903, %v1966
        %v1973 = vsub.f32 %v1908, %v1966
        %v1974 = vsub.f32 %v1911, %v1966
        %v1975 = vsub.f32 %v1916, %v1966
        %v1976 = vsub.f32 %v1919, %v1966
        %v1977 = vsub.f32 %v1924, %v1966
        %v1978 = vsub.f32 %v1927, %v1966
        %v1979 = vsub.f32 %v1932, %v1966
        %v1980 = vsub.f32 %v1935, %v1966
        %v1981 = vsub.f32 %v1940, %v1966
        %v1982 = vsub.f32 %v1943, %v1966
        %v1983 = vmul.f32 %v1967, 1.442695
        %v1984 = vpow.pop %v1983
        %v1985 = vmul.f32 %v1968, 1.442695
        %v1986 = vpow.pop %v1985
        %v1987 = vmul.f32 %v1969, 1.442695
        %v1988 = vpow.pop %v1987
        %v1989 = vmul.f32 %v1970, 1.442695
        %v1990 = vpow.pop %v1989
        %v1991 = vmul.f32 %v1971, 1.442695
        %v1992 = vpow.pop %v1991
        %v1993 = vmul.f32 %v1972, 1.442695
        %v1994 = vpow.pop %v1993
        %v1995 = vmul.f32 %v1973, 1.442695
        %v1996 = vpow.pop %v1995
        %v1997 = vmul.f32 %v1974, 1.442695
        %v1998 = vpow.pop %v1997
        %v1999 = vmul.f32 %v1975, 1.442695
        %v2000 = vpow.pop %v1999
        %v2001 = vmul.f32 %v1976, 1.442695
        %v2002 = vpow.pop %v2001
        %v2003 = vmul.f32 %v1977, 1.442695
        %v2004 = vpow.pop %v2003
        %v2005 = vmul.f32 %v1978, 1.442695
        %v2006 = vpow.pop %v2005
        %v2007 = vmul.f32 %v1979, 1.442695
        %v2008 = vpow.pop %v2007
        %v2009 = vmul.f32 %v1980, 1.442695
        %v2010 = vpow.pop %v2009
        %v2011 = vmul.f32 %v1981, 1.442695
        %v2012 = vpow.pop %v2011
        %v2013 = vmul.f32 %v1982, 1.442695
        %v2014 = vpow.pop %v2013
        %v2015 = vadd.f32 %v1984, %v1986
        %v2016 = vadd.f32 %v2015, %v1988
        %v2017 = vadd.f32 %v2016, %v1990
        %v2018 = vadd.f32 %v2017, %v1992
        %v2019 = vadd.f32 %v2018, %v1994
        %v2020 = vadd.f32 %v2019, %v1996
        %v2021 = vadd.f32 %v2020, %v1998
        %v2022 = vadd.f32 %v2021, %v2000
        %v2023 = vadd.f32 %v2022, %v2002
        %v2024 = vadd.f32 %v2023, %v2004
        %v2025 = vadd.f32 %v2024, %v2006
        %v2026 = vadd.f32 %v2025, %v2008
        %v2027 = vadd.f32 %v2026, %v2010
        %v2028 = vadd.f32 %v2027, %v2012
        %v2029 = vadd.f32 %v2028, %v2014
        %v2030 = vrot.slane %v2029, 4
        %v2031 = vadd.f32 %v2029, %v2030
        %v2032 = vrot.slane %v2031, 2
        %v2033 = vadd.f32 %v2031, %v2032
        %v2034 = vrot.slane %v2033, 1
        %v2035 = vadd.f32 %v2033, %v2034
        %v2036 = vrcp.pop %v2035
        %v2037 = vmul.f32 %v1984, %v2036
        %v2038 = vmul.f32 %v1986, %v2036
        %v2039 = vmul.f32 %v1988, %v2036
        %v2040 = vmul.f32 %v1990, %v2036
        %v2041 = vmul.f32 %v1992, %v2036
        %v2042 = vmul.f32 %v1994, %v2036
        %v2043 = vmul.f32 %v1996, %v2036
        %v2044 = vmul.f32 %v1998, %v2036
        %v2045 = vmul.f32 %v2000, %v2036
        %v2046 = vmul.f32 %v2002, %v2036
        %v2047 = vmul.f32 %v2004, %v2036
        %v2048 = vmul.f32 %v2006, %v2036
        %v2049 = vmul.f32 %v2008, %v2036
        %v2050 = vmul.f32 %v2010, %v2036
        %v2051 = vmul.f32 %v2012, %v2036
        %v2052 = vmul.f32 %v2014, %v2036
        %v2053 = vpack.c.bf16 %v2038, %v2037
        %v2054 = vpack.c.bf16 %v2040, %v2039
        %v2055 = vpack.c.bf16 %v2042, %v2041
        %v2056 = vpack.c.bf16 %v2044, %v2043
        %v2057 = vpack.c.bf16 %v2046, %v2045
        %v2058 = vpack.c.bf16 %v2048, %v2047
        %v2059 = vpack.c.bf16 %v2050, %v2049
        %v2060 = vpack.c.bf16 %v2052, %v2051
        %2061 = vxpose.xlu0.c.b16.start [1/8] %v1833, 128
        %2062 = vxpose.xlu0.c.b16.cont [2/8] %v1835, 128
        %2063 = vxpose.xlu0.c.b16.cont [3/8] %v1837, 128
        %2064 = vxpose.xlu0.c.b16.cont [4/8] %v1839, 128
        %2065 = vxpose.xlu0.c.b16.cont [5/8] %v1841, 128
        %2066 = vxpose.xlu0.c.b16.cont [6/8] %v1843, 128
        %2067 = vxpose.xlu0.c.b16.cont [7/8] %v1845, 128
        %2068 = vxpose.xlu0.c.b16.end [8/8] %v1847, 128
        %v2069 = vpop.trf.xlu0
        %v2070 = vpop.trf.xlu0
        %v2071 = vpop.trf.xlu0
        %v2072 = vpop.trf.xlu0
        %v2073 = vpop.trf.xlu0
        %v2074 = vpop.trf.xlu0
        %v2075 = vpop.trf.xlu0
        %v2076 = vpop.trf.xlu0
        %2077 = vxpose.xlu0.c.b16.start [1/8] %v1834, 128
        %2078 = vxpose.xlu0.c.b16.cont [2/8] %v1836, 128
        %2079 = vxpose.xlu0.c.b16.cont [3/8] %v1838, 128
        %2080 = vxpose.xlu0.c.b16.cont [4/8] %v1840, 128
        %2081 = vxpose.xlu0.c.b16.cont [5/8] %v1842, 128
        %2082 = vxpose.xlu0.c.b16.cont [6/8] %v1844, 128
        %2083 = vxpose.xlu0.c.b16.cont [7/8] %v1846, 128
        %2084 = vxpose.xlu0.c.b16.end [8/8] %v1848, 128
        %v2085 = vpop.trf.xlu0
        %v2086 = vpop.trf.xlu0
        %v2087 = vpop.trf.xlu0
        %v2088 = vpop.trf.xlu0
        %v2089 = vpop.trf.xlu0
        %v2090 = vpop.trf.xlu0
        %v2091 = vpop.trf.xlu0
        %v2092 = vpop.trf.xlu0
        %2093 = vmatprep.subr.bf16.mxu0 0
        %2094 = vmatpush1.bf16.msra.mxu0 %v2053
        %2095 = vmatprep.subr.bf16.mxu0 0
        %2096 = vmatpush1.bf16.msra.mxu0 %v2054
        %2097 = vmatprep.subr.bf16.mxu0 0
        %2098 = vmatpush1.bf16.msra.mxu0 %v2055
        %2099 = vmatprep.subr.bf16.mxu0 0
        %2100 = vmatpush1.bf16.msra.mxu0 %v2056
        %2101 = vmatprep.subr.bf16.mxu0 0
        %2102 = vmatpush1.bf16.msra.mxu0 %v2057
        %2103 = vmatprep.subr.bf16.mxu0 0
        %2104 = vmatpush1.bf16.msra.mxu0 %v2058
        %2105 = vmatprep.subr.bf16.mxu0 0
        %2106 = vmatpush1.bf16.msra.mxu0 %v2059
        %2107 = vmatprep.subr.bf16.mxu0 0
        %2108 = vmatpush1.bf16.msra.mxu0 %v2060
        %2109 = vmatprep.subr.bf16.mxu0 0
        %2110 = vmatpush1.bf16.msra.mxu0 0
        %2111 = vmatprep.subr.bf16.mxu0 0
        %2112 = vmatpush1.bf16.msra.mxu0 0
        %2113 = vmatprep.subr.bf16.mxu0 0
        %2114 = vmatpush1.bf16.msra.mxu0 0
        %2115 = vmatprep.subr.bf16.mxu0 0
        %2116 = vmatpush1.bf16.msra.mxu0 0
        %2117 = vmatprep.subr.bf16.mxu0 0
        %2118 = vmatpush1.bf16.msra.mxu0 0
        %2119 = vmatprep.subr.bf16.mxu0 0
        %2120 = vmatpush1.bf16.msra.mxu0 0
        %2121 = vmatprep.subr.bf16.mxu0 0
        %2122 = vmatpush1.bf16.msra.mxu0 0
        %2123 = vmatprep.subr.bf16.mxu0 0
        %2124 = vmatpush1.bf16.msra.mxu0 0
        %2125 = vmatprep.mubr.bf16.mxu0 0
        %2126 = vmatmul.mubr.bf16.gmra.mrb[0].mxu0 %v2069
        %v2127 = vpop.f32.mrb[0].mxu0
        %v2128 = vadd.f32 0.0, %v2127
        %v2129 = vpop.f32.mrb[0].mxu0
        %v2130 = vpop.f32.mrb[0].mxu0
        %v2131 = vadd.f32 0.0, %v2130
        %v2132 = vpop.f32.mrb[0].mxu0
        %2133 = vmatprep.mubr.bf16.mxu0 0
        %2134 = vmatmul.mubr.bf16.gmra.mrb[0].mxu0 %v2070
        %v2135 = vpop.f32.mrb[0].mxu0
        %v2136 = vadd.f32 0.0, %v2135
        %v2137 = vpop.f32.mrb[0].mxu0
        %v2138 = vpop.f32.mrb[0].mxu0
        %v2139 = vadd.f32 0.0, %v2138
        %v2140 = vpop.f32.mrb[0].mxu0
        %2141 = vmatprep.mubr.bf16.mxu0 0
        %2142 = vmatmul.mubr.bf16.gmra.mrb[0].mxu0 %v2071
        %v2143 = vpop.f32.mrb[0].mxu0
        %v2144 = vadd.f32 0.0, %v2143
        %v2145 = vpop.f32.mrb[0].mxu0
        %v2146 = vpop.f32.mrb[0].mxu0
        %v2147 = vadd.f32 0.0, %v2146
        %v2148 = vpop.f32.mrb[0].mxu0
        %2149 = vmatprep.mubr.bf16.mxu0 0
        %2150 = vmatmul.mubr.bf16.gmra.mrb[0].mxu0 %v2072
        %v2151 = vpop.f32.mrb[0].mxu0
        %v2152 = vadd.f32 0.0, %v2151
        %v2153 = vpop.f32.mrb[0].mxu0
        %v2154 = vpop.f32.mrb[0].mxu0
        %v2155 = vadd.f32 0.0, %v2154
        %v2156 = vpop.f32.mrb[0].mxu0
        %2157 = vmatprep.mubr.bf16.mxu0 0
        %2158 = vmatmul.mubr.bf16.gmra.mrb[0].mxu0 %v2073
        %v2159 = vpop.f32.mrb[0].mxu0
        %v2160 = vadd.f32 0.0, %v2159
        %v2161 = vpop.f32.mrb[0].mxu0
        %v2162 = vpop.f32.mrb[0].mxu0
        %v2163 = vadd.f32 0.0, %v2162
        %v2164 = vpop.f32.mrb[0].mxu0
        %2165 = vmatprep.mubr.bf16.mxu0 0
        %2166 = vmatmul.mubr.bf16.gmra.mrb[0].mxu0 %v2074
        %v2167 = vpop.f32.mrb[0].mxu0
        %v2168 = vadd.f32 0.0, %v2167
        %v2169 = vpop.f32.mrb[0].mxu0
        %v2170 = vpop.f32.mrb[0].mxu0
        %v2171 = vadd.f32 0.0, %v2170
        %v2172 = vpop.f32.mrb[0].mxu0
        %2173 = vmatprep.mubr.bf16.mxu0 0
        %2174 = vmatmul.mubr.bf16.gmra.mrb[0].mxu0 %v2075
        %v2175 = vpop.f32.mrb[0].mxu0
        %v2176 = vadd.f32 0.0, %v2175
        %v2177 = vpop.f32.mrb[0].mxu0
        %v2178 = vpop.f32.mrb[0].mxu0
        %v2179 = vadd.f32 0.0, %v2178
        %v2180 = vpop.f32.mrb[0].mxu0
        %2181 = vmatprep.mubr.bf16.mxu0 0
        %2182 = vmatmul.mubr.bf16.gmra.mrb[0].mxu0 %v2076
        %v2183 = vpop.f32.mrb[0].mxu0
        %v2184 = vadd.f32 0.0, %v2183
        %v2185 = vpop.f32.mrb[0].mxu0
        %v2186 = vpop.f32.mrb[0].mxu0
        %v2187 = vadd.f32 0.0, %v2186
        %v2188 = vpop.f32.mrb[0].mxu0
        %2189 = vmatprep.mubr.bf16.mxu0 0
        %2190 = vmatmul.mubr.bf16.gmra.mrb[0].mxu0 %v2085
        %v2191 = vpop.f32.mrb[0].mxu0
        %v2192 = vadd.f32 0.0, %v2191
        %v2193 = vpop.f32.mrb[0].mxu0
        %v2194 = vpop.f32.mrb[0].mxu0
        %v2195 = vadd.f32 0.0, %v2194
        %v2196 = vpop.f32.mrb[0].mxu0
        %2197 = vmatprep.mubr.bf16.mxu0 0
        %2198 = vmatmul.mubr.bf16.gmra.mrb[0].mxu0 %v2086
        %v2199 = vpop.f32.mrb[0].mxu0
        %v2200 = vadd.f32 0.0, %v2199
        %v2201 = vpop.f32.mrb[0].mxu0
        %v2202 = vpop.f32.mrb[0].mxu0
        %v2203 = vadd.f32 0.0, %v2202
        %v2204 = vpop.f32.mrb[0].mxu0
        %2205 = vmatprep.mubr.bf16.mxu0 0
        %2206 = vmatmul.mubr.bf16.gmra.mrb[0].mxu0 %v2087
        %v2207 = vpop.f32.mrb[0].mxu0
        %v2208 = vadd.f32 0.0, %v2207
        %v2209 = vpop.f32.mrb[0].mxu0
        %v2210 = vpop.f32.mrb[0].mxu0
        %v2211 = vadd.f32 0.0, %v2210
        %v2212 = vpop.f32.mrb[0].mxu0
        %2213 = vmatprep.mubr.bf16.mxu0 0
        %2214 = vmatmul.mubr.bf16.gmra.mrb[0].mxu0 %v2088
        %v2215 = vpop.f32.mrb[0].mxu0
        %v2216 = vadd.f32 0.0, %v2215
        %v2217 = vpop.f32.mrb[0].mxu0
        %v2218 = vpop.f32.mrb[0].mxu0
        %v2219 = vadd.f32 0.0, %v2218
        %v2220 = vpop.f32.mrb[0].mxu0
        %2221 = vmatprep.mubr.bf16.mxu0 0
        %2222 = vmatmul.mubr.bf16.gmra.mrb[0].mxu0 %v2089
        %v2223 = vpop.f32.mrb[0].mxu0
        %v2224 = vadd.f32 0.0, %v2223
        %v2225 = vpop.f32.mrb[0].mxu0
        %v2226 = vpop.f32.mrb[0].mxu0
        %v2227 = vadd.f32 0.0, %v2226
        %v2228 = vpop.f32.mrb[0].mxu0
        %2229 = vmatprep.mubr.bf16.mxu0 0
        %2230 = vmatmul.mubr.bf16.gmra.mrb[0].mxu0 %v2090
        %v2231 = vpop.f32.mrb[0].mxu0
        %v2232 = vadd.f32 0.0, %v2231
        %v2233 = vpop.f32.mrb[0].mxu0
        %v2234 = vpop.f32.mrb[0].mxu0
        %v2235 = vadd.f32 0.0, %v2234
        %v2236 = vpop.f32.mrb[0].mxu0
        %2237 = vmatprep.mubr.bf16.mxu0 0
        %2238 = vmatmul.mubr.bf16.gmra.mrb[0].mxu0 %v2091
        %v2239 = vpop.f32.mrb[0].mxu0
        %v2240 = vadd.f32 0.0, %v2239
        %v2241 = vpop.f32.mrb[0].mxu0
        %v2242 = vpop.f32.mrb[0].mxu0
        %v2243 = vadd.f32 0.0, %v2242
        %v2244 = vpop.f32.mrb[0].mxu0
        %2245 = vmatprep.mubr.bf16.mxu0 0
        %2246 = vmatmul.mubr.bf16.gmra.mrb[0].mxu0 %v2092
        %v2247 = vpop.f32.mrb[0].mxu0
        %v2248 = vadd.f32 0.0, %v2247
        %v2249 = vpop.f32.mrb[0].mxu0
        %v2250 = vpop.f32.mrb[0].mxu0
        %v2251 = vadd.f32 0.0, %v2250
        %v2252 = vpop.f32.mrb[0].mxu0
        %2253 = vdwg.mxu0
        %s2254 = scalar_lea.vmem %s189, 256 [#allocation5]
        %2255 = vst [vmem:[%s2254] sm:$0xff] %v2128
        %2256 = vst [vmem:[%s2254 + $0x8] sm:$0xff] %v2131
        %2257 = vst [vmem:[%s2254 + $0x10] sm:$0xff] %v2136
        %2258 = vst [vmem:[%s2254 + $0x18] sm:$0xff] %v2139
        %2259 = vst [vmem:[%s2254 + $0x20] sm:$0xff] %v2144
        %2260 = vst [vmem:[%s2254 + $0x28] sm:$0xff] %v2147
        %2261 = vst [vmem:[%s2254 + $0x30] sm:$0xff] %v2152
        %2262 = vst [vmem:[%s2254 + $0x38] sm:$0xff] %v2155
        %2263 = vst [vmem:[%s2254 + $0x40] sm:$0xff] %v2160
        %2264 = vst [vmem:[%s2254 + $0x48] sm:$0xff] %v2163
        %2265 = vst [vmem:[%s2254 + $0x50] sm:$0xff] %v2168
        %2266 = vst [vmem:[%s2254 + $0x58] sm:$0xff] %v2171
        %2267 = vst [vmem:[%s2254 + $0x60] sm:$0xff] %v2176
        %2268 = vst [vmem:[%s2254 + $0x68] sm:$0xff] %v2179
        %2269 = vst [vmem:[%s2254 + $0x70] sm:$0xff] %v2184
        %2270 = vst [vmem:[%s2254 + $0x78] sm:$0xff] %v2187
        %2271 = vst [vmem:[%s2254 + $0x80] sm:$0xff] %v2192
        %2272 = vst [vmem:[%s2254 + $0x88] sm:$0xff] %v2195
        %2273 = vst [vmem:[%s2254 + $0x90] sm:$0xff] %v2200
        %2274 = vst [vmem:[%s2254 + $0x98] sm:$0xff] %v2203
        %2275 = vst [vmem:[%s2254 + $0xa0] sm:$0xff] %v2208
        %2276 = vst [vmem:[%s2254 + $0xa8] sm:$0xff] %v2211
        %2277 = vst [vmem:[%s2254 + $0xb0] sm:$0xff] %v2216
        %2278 = vst [vmem:[%s2254 + $0xb8] sm:$0xff] %v2219
        %2279 = vst [vmem:[%s2254 + $0xc0] sm:$0xff] %v2224
        %2280 = vst [vmem:[%s2254 + $0xc8] sm:$0xff] %v2227
        %2281 = vst [vmem:[%s2254 + $0xd0] sm:$0xff] %v2232
        %2282 = vst [vmem:[%s2254 + $0xd8] sm:$0xff] %v2235
        %2283 = vst [vmem:[%s2254 + $0xe0] sm:$0xff] %v2240
        %2284 = vst [vmem:[%s2254 + $0xe8] sm:$0xff] %v2243
        %2285 = vst [vmem:[%s2254 + $0xf0] sm:$0xff] %v2248
        %2286 = vst [vmem:[%s2254 + $0xf8] sm:$0xff] %v2251
        %s2287 = sand.u32 %s96, 1
        %s2288 = scalar_lea.sflag [#allocation4], %s2287
        %s2289 = sand.u32 %s96, 1
        %s2290 = smul.addr %s2289, 512
        %s2291 = scalar_lea.vmem [#allocation5], %s2290
        // Predicated region
        $region37: #{attention_forward.1} parent=31 // pred_check
          %p2292 = pneg %p106
        $region38: #{attention_forward.1} parent=31 // pred_check_branch
          %2294 = sbr.rel (%p2292) target = $region40
        $region39: #{attention_forward.1} parent=31 // pred_region
          %s2295 = smul.u32 2, %s20
          %s2297 = ssub.s32 8192, 8192
          %2298 = vsyncadd %s2288, %s2297
          %s2299 = smul.addr %s2295, 32
          %s2300 = smul.addr %s2299, 128
          %s2301 = scalar_lea.hbm %s3, %s2300
          %s2302 = sshll.u32 %s2291, 4
          %s2303 = int_to_ptr.vmem [resolvable:$true] %s2302
          %2308 = dma.vmem_to_hbm [thread:$0]  %s2303, 8192, %s2301, %s2288, 128, 128, 8
        $region40: #{attention_forward.1} parent=31 // pred_fallthru
          _
      $region32: #{attention_forward.1} parent=5 // pred_fallthru
        _
      %p2309 = scmp.le.s32.totalorder 2, %s15
      // Predicated region
      $region41: #{attention_forward.1} parent=5 // pred_check
        %p2310 = pneg %p2309
      $region42: #{attention_forward.1} parent=5 // pred_check_branch
        %2312 = sbr.rel (%p2310) target = $region44
      $region43: #{attention_forward.1} parent=5 // pred_region
        %s2313 = ssub.s32 %s15, 2
        // Predicated region
        $region45: #{attention_forward.1} parent=43 // pred_check
          %p2314 = pneg %p112
        $region46: #{attention_forward.1} parent=43 // pred_check_branch
          %2316 = sbr.rel (%p2314) target = $region48
        $region47: #{attention_forward.1} parent=43 // pred_region
          %s2317 = sand.u32 %s97, 1
          %s2318 = scalar_lea.sflag [#allocation4], %s2317
          %s2319 = sand.u32 %s97, 1
          %s2320 = smul.addr %s2319, 512
          %s2321 = scalar_lea.vmem [#allocation5], %s2320
          %2322 = dma.done %s2318, 8192
        $region48: #{attention_forward.1} parent=43 // pred_fallthru
          _
      $region44: #{attention_forward.1} parent=5 // pred_fallthru
        _
    $region6: #{attention_forward.1} parent=1 // loop_footer
      %s19 = sadd.s32 1, %s15
    $region7: #{attention_forward.1} parent=1 // loop_footer_branch
      %14 = sbr.rel target = $region3
    $region8: #{attention_forward.1} parent=1 // loop_exit
      _
    %2323 = vsyncpa [#allocation3], 1
    %s2324 = scalar_lea.sflag [#allocation3], 1
    %2325 = vsyncpa %s2324, 1
    %2326 = vsyncpa [#allocation4], 1
    %s2327 = scalar_lea.sflag [#allocation4], 1
    %2328 = vsyncpa %s2327, 1

</llo_original>
